<compile_context>
chip_gen: v7x
topology: tpu7x:2x2x1
jax: 0.10.0
libtpu: 0.0.40
codegen_flags: <defaults>
</compile_context>

<pallas_src>
import functools

import jax
import jax.numpy as jnp
import numpy as np
from jax.experimental import pallas as pl
from jax.experimental.pallas import tpu as pltpu

# small, module-consistent sizes: seq=8, batch=2, d_model=32, n_head=4
L, N, E, H = 8, 2, 32, 4
EPS = 1e-5


def _rab_kernel(*refs, n_head, has_mask):
    """One grid step = one batch element's (L, E) token slab."""
    if has_mask:
        (x_ref, mask_ref, vecs_ref, bqkv_ref, bfc_ref,
         wqkv_ref, wo_ref, wfc_ref, wproj_ref, out_ref) = refs
    else:
        (x_ref, vecs_ref, bqkv_ref, bfc_ref,
         wqkv_ref, wo_ref, wfc_ref, wproj_ref, out_ref) = refs
        mask_ref = None

    seq, d_model = x_ref.shape
    f32, bf16 = jnp.float32, jnp.bfloat16

    def layernorm(v, g, b):                 # over last dim, fp32
        mu = jnp.mean(v, axis=-1, keepdims=True)
        c = v - mu
        var = jnp.mean(c * c, axis=-1, keepdims=True)
        return c * jax.lax.rsqrt(var + EPS) * g + b

    # packed small vectors: ln1_g, ln1_b, b_o, ln2_g, ln2_b, b_proj  (one DMA)
    V = vecs_ref[...]                                        # (6, E) f32
    ln1_g, ln1_b = V[0:1, :], V[1:2, :]
    b_o = V[2:3, :]
    ln2_g, ln2_b = V[3:4, :], V[4:5, :]
    b_proj = V[5:6, :]

    x = x_ref[...].astype(f32)                               # (L, E)

    # --- ln_1 ---
    x1 = layernorm(x, ln1_g, ln1_b)
    x1_bf = x1.astype(bf16)          # hoisted: reused by all 3*H projections

    bqkv = bqkv_ref[...]                                     # (3H, dh) f32
    if has_mask:
        mask = mask_ref[...].astype(f32)                     # (L, L), loaded once

    # --- multi-head self-attention ---
    # Per-head weights are indexed on the leading axis (free), so there is no
    # lane-axis slicing and no concat; the per-head output projection is summed
    # into one (L, E) accumulator, bounding live ranges (at larger H switch the
    # static loop to lax.fori_loop(..., unroll=True)).
    # 1/sqrt(d_head) is pre-folded into the Q weights/bias in prepare_params().
    attn = jnp.zeros((seq, d_model), f32)
    nt_dims = (((1,), (1,)), ((), ()))                       # q @ k^T
    for h in range(n_head):
        q = (jnp.dot(x1_bf, wqkv_ref[h], preferred_element_type=f32)
             + bqkv[h:h + 1, :])                             # (L, dh)
        k = (jnp.dot(x1_bf, wqkv_ref[n_head + h], preferred_element_type=f32)
             + bqkv[n_head + h:n_head + h + 1, :])
        v = (jnp.dot(x1_bf, wqkv_ref[2 * n_head + h], preferred_element_type=f32)
             + bqkv[2 * n_head + h:2 * n_head + h + 1, :])
        s = jax.lax.dot_general(q, k, nt_dims,
                                preferred_element_type=f32)  # (L, L)
        if has_mask:
            s = s + mask
        s = s - jnp.max(s, axis=-1, keepdims=True)
        p = jnp.exp(s)
        # approx reciprocal: EUP slot; fine for inference-tolerance (not bit-parity)
        p = p * pl.reciprocal(jnp.sum(p, axis=-1, keepdims=True), approx=True)
        o = jnp.dot(p, v, preferred_element_type=f32)        # (L, dh)
        attn = attn + jnp.dot(o.astype(bf16), wo_ref[h],
                              preferred_element_type=f32)    # += o @ Wo_h

    # residual on the ln_1 output (exactly as the module's forward is written)
    x2 = x1 + attn + b_o

    # --- ln_2 + MLP (c_fc -> QuickGELU -> c_proj) ---
    x2n = layernorm(x2, ln2_g, ln2_b)
    h_mid = (jnp.dot(x2n.astype(bf16), wfc_ref[...], preferred_element_type=f32)
             + bfc_ref[...])                                 # (L, 4E) f32
    h_act = h_mid * jax.nn.sigmoid(1.702 * h_mid)            # QuickGELU, f32
    mlp = (jnp.dot(h_act.astype(bf16), wproj_ref[...], preferred_element_type=f32)
           + b_proj)

    out_ref[...] = (x2 + mlp).astype(out_ref.dtype)


def prepare_params(params, n_head):
    """One-time weight preparation (do NOT re-run per call):
    transposes, per-head split, attention-scale folding, bf16 casts, packing."""
    f32, bf16 = jnp.float32, jnp.bfloat16
    w_qkv = jnp.asarray(params['w_qkv'], f32)                # (3E, E) torch (out, in)
    b_qkv = jnp.asarray(params['b_qkv'], f32)                # (3E,)
    d_model = w_qkv.shape[1]
    d_head = d_model // n_head

    # fold 1/sqrt(d_head) into the Q rows of the fused in-projection
    scale = 1.0 / float(d_head) ** 0.5
    row_scale = jnp.concatenate([jnp.full((d_model,), scale, f32),
                                 jnp.ones((2 * d_model,), f32)])
    w_qkv = w_qkv * row_scale[:, None]
    b_qkv = b_qkv * row_scale

    # per-(q/k/v, head) slabs, input-major: (3H, E, dh); q heads first, then k, then v
    w_qkv_heads = jnp.transpose(w_qkv.reshape(3 * n_head, d_head, d_model), (0, 2, 1))
    b_qkv_heads = b_qkv.reshape(3 * n_head, d_head)

    # output projection split per head along its input (concat-head) axis: (H, dh, E)
    wo_heads = jnp.asarray(params['w_o'], f32).T.reshape(n_head, d_head, d_model)

    # pack the eight tiny per-E vectors into one slab (single DMA)
    vecs = jnp.stack([params['ln1_g'], params['ln1_b'], params['b_o'],
                      params['ln2_g'], params['ln2_b'], params['b_proj']]).astype(f32)

    return {
        'vecs': vecs,                                                  # (6, E)  f32
        'b_qkv_heads': b_qkv_heads.astype(f32),                        # (3H, dh) f32
        'b_fc': jnp.asarray(params['b_fc'], f32).reshape(1, -1),       # (1, 4E) f32
        'w_qkv_heads': w_qkv_heads.astype(bf16),                       # (3H, E, dh)
        'wo_heads': wo_heads.astype(bf16),                             # (H, dh, E)
        'w_fc': jnp.asarray(params['w_fc'], f32).T.astype(bf16),       # (E, 4E)
        'w_proj': jnp.asarray(params['w_proj'], f32).T.astype(bf16),   # (4E, E)
    }


@functools.partial(jax.jit, static_argnames=("n_head",))
def residual_attention_block(x_lne, prep, n_head, attn_mask=None):
    """x_lne: (L, N, E); prep: output of prepare_params(); attn_mask: (L, L) or None."""
    seq, n_batch, d_model = x_lne.shape

    # (L, N, E) -> (N, L, E).  At real sizes accept (N, L, E) at the API
    # boundary to drop this HBM pass; kept here for the torch MHA convention.
    x_nle = jnp.transpose(x_lne, (1, 0, 2))

    def full_spec(a):               # whole array resident, DMA'd once (constant index)
        nd = a.ndim
        return pl.BlockSpec(a.shape, lambda b: (0,) * nd)

    has_mask = attn_mask is not None
    args = [x_nle]
    specs = [pl.BlockSpec((None, seq, d_model), lambda b: (b, 0, 0))]
    if has_mask:
        m = jnp.asarray(attn_mask, jnp.float32)
        args.append(m)
        specs.append(full_spec(m))
    for name in ('vecs', 'b_qkv_heads', 'b_fc',
                 'w_qkv_heads', 'wo_heads', 'w_fc', 'w_proj'):
        a = prep[name]
        args.append(a)
        specs.append(full_spec(a))

    out_nle = pl.pallas_call(
        functools.partial(_rab_kernel, n_head=n_head, has_mask=has_mask),
        grid=(n_batch,),                      # batch axis; "parallel" -> v7x megacore
        in_specs=specs,
        out_specs=pl.BlockSpec((None, seq, d_model), lambda b: (b, 0, 0)),
        out_shape=jax.ShapeDtypeStruct((n_batch, seq, d_model), x_lne.dtype),
        compiler_params=pltpu.CompilerParams(dimension_semantics=("parallel",)),
    )(*args)

    return jnp.transpose(out_nle, (1, 0, 2))


def reference(x, params, n_head, attn_mask=None):
    """Pure-JAX f32 reference mirroring the PyTorch module exactly as written."""
    seq, n_batch, d_model = x.shape
    d_head = d_model // n_head

    def ln(v, g, b):
        v = v.astype(jnp.float32)
        mu = v.mean(-1, keepdims=True)
        var = ((v - mu) ** 2).mean(-1, keepdims=True)
        return (v - mu) / jnp.sqrt(var + EPS) * g + b

    x1 = ln(x, params['ln1_g'], params['ln1_b'])
    qkv = x1 @ params['w_qkv'].T + params['b_qkv']
    q, k, v = jnp.split(qkv, 3, axis=-1)

    def heads(t):
        return t.reshape(seq, n_batch, n_head, d_head).transpose(1, 2, 0, 3)

    qh, kh, vh = heads(q), heads(k), heads(v)
    scores = jnp.einsum('nhqd,nhkd->nhqk', qh, kh) / jnp.sqrt(d_head)
    if attn_mask is not None:
        scores = scores + attn_mask
    p = jax.nn.softmax(scores, axis=-1)
    o = jnp.einsum('nhqk,nhkd->nhqd', p, vh)
    o = o.transpose(2, 0, 1, 3).reshape(seq, n_batch, d_model)
    attn = o @ params['w_o'].T + params['b_o']
    x2 = x1 + attn
    h2 = ln(x2, params['ln2_g'], params['ln2_b'])
    hm = h2 @ params['w_fc'].T + params['b_fc']
    hm = hm * jax.nn.sigmoid(1.702 * hm)
    return x2 + hm @ params['w_proj'].T + params['b_proj']


if __name__ == "__main__":
    key = jax.random.PRNGKey(0)
    ks = jax.random.split(key, 12)
    x = jax.random.normal(ks[0], (L, N, E), jnp.float32)

    params = {
        'ln1_g': 1.0 + 0.1 * jax.random.normal(ks[1], (E,), jnp.float32),
        'ln1_b': 0.1 * jax.random.normal(ks[2], (E,), jnp.float32),
        'w_qkv': 0.05 * jax.random.normal(ks[3], (3 * E, E), jnp.float32),
        'b_qkv': 0.05 * jax.random.normal(ks[4], (3 * E,), jnp.float32),
        'w_o':   0.05 * jax.random.normal(ks[5], (E, E), jnp.float32),
        'b_o':   0.05 * jax.random.normal(ks[6], (E,), jnp.float32),
        'ln2_g': 1.0 + 0.1 * jax.random.normal(ks[7], (E,), jnp.float32),
        'ln2_b': 0.1 * jax.random.normal(ks[8], (E,), jnp.float32),
        'w_fc':  0.05 * jax.random.normal(ks[9], (4 * E, E), jnp.float32),
        'b_fc':  0.05 * jax.random.normal(ks[10], (4 * E,), jnp.float32),
        'w_proj': 0.05 * jax.random.normal(ks[11], (E, 4 * E), jnp.float32),
        'b_proj': jnp.zeros((E,), jnp.float32),
    }

    # one-time weight prep (transposes / head split / scale fold / bf16 casts)
    prep = prepare_params(params, n_head=H)

    # tolerance: kernel feeds bf16 operands to the MXU (f32 accumulate) while the
    # reference is pure f32, so ~1e-3-class element errors are expected.
    TOL = dict(rtol=1e-2, atol=1e-2)

    # 1) attn_mask=None path (maskless kernel variant)
    out = residual_attention_block(x, prep, n_head=H, attn_mask=None)
    out = jax.block_until_ready(out)
    ref = reference(x, params, n_head=H, attn_mask=None)
    np.testing.assert_allclose(np.asarray(out), np.asarray(ref), **TOL)

    # 2) causal additive-mask path (masked kernel variant)
    causal = jnp.triu(jnp.full((L, L), -1e9, jnp.float32), k=1)
    out_m = residual_attention_block(x, prep, n_head=H, attn_mask=causal)
    out_m = jax.block_until_ready(out_m)
    ref_m = reference(x, params, n_head=H, attn_mask=causal)
    np.testing.assert_allclose(np.asarray(out_m), np.asarray(ref_m), **TOL)

    print("KERNEL_OK")
</pallas_src>

<mosaic_0001>
module attributes {stable_mosaic.version = 11 : i64} {
  func.func @_rab_kernel(%arg0: i32, %arg1: memref<1x8x32xf32, #tpu.memory_space<vmem>>, %arg2: memref<6x32xf32, #tpu.memory_space<vmem>>, %arg3: memref<12x8xf32, #tpu.memory_space<vmem>>, %arg4: memref<1x128xf32, #tpu.memory_space<vmem>>, %arg5: memref<12x32x8xbf16, #tpu.memory_space<vmem>>, %arg6: memref<4x8x32xbf16, #tpu.memory_space<vmem>>, %arg7: memref<32x128xbf16, #tpu.memory_space<vmem>>, %arg8: memref<128x32xbf16, #tpu.memory_space<vmem>>, %arg9: memref<1x8x32xf32, #tpu.memory_space<vmem>>) attributes {dimension_semantics = [#tpu.dimension_semantics<parallel>], iteration_bounds = array<i64: 2>, scalar_prefetch = 0 : i64, scratch_operands = 0 : i64, tpu.core_type = #tpu.core_type<tc>, window_params = [{transform_indices = @transform_0, window_bounds = array<i64: 1, 8, 32>}, {pipeline_mode = #tpu.pipeline_mode<synchronous>, transform_indices = @transform_1, window_bounds = array<i64: 6, 32>}, {pipeline_mode = #tpu.pipeline_mode<synchronous>, transform_indices = @transform_2, window_bounds = array<i64: 12, 8>}, {pipeline_mode = #tpu.pipeline_mode<synchronous>, transform_indices = @transform_3, window_bounds = array<i64: 1, 128>}, {pipeline_mode = #tpu.pipeline_mode<synchronous>, transform_indices = @transform_4, window_bounds = array<i64: 12, 32, 8>}, {pipeline_mode = #tpu.pipeline_mode<synchronous>, transform_indices = @transform_5, window_bounds = array<i64: 4, 8, 32>}, {pipeline_mode = #tpu.pipeline_mode<synchronous>, transform_indices = @transform_6, window_bounds = array<i64: 32, 128>}, {pipeline_mode = #tpu.pipeline_mode<synchronous>, transform_indices = @transform_7, window_bounds = array<i64: 128, 32>}, {transform_indices = @transform_8, window_bounds = array<i64: 1, 8, 32>}]} {
    %c0 = arith.constant 0 : index
    %c0_0 = arith.constant 0 : index
    %0 = vector.load %arg2[%c0, %c0_0] : memref<6x32xf32, #tpu.memory_space<vmem>>, vector<6x32xf32>
    %1 = vector.extract_strided_slice %0 {offsets = [0, 0], sizes = [1, 32], strides = [1, 1]} : vector<6x32xf32> to vector<1x32xf32>
    %2 = vector.extract_strided_slice %0 {offsets = [1, 0], sizes = [1, 32], strides = [1, 1]} : vector<6x32xf32> to vector<1x32xf32>
    %3 = vector.extract_strided_slice %0 {offsets = [2, 0], sizes = [1, 32], strides = [1, 1]} : vector<6x32xf32> to vector<1x32xf32>
    %4 = vector.extract_strided_slice %0 {offsets = [3, 0], sizes = [1, 32], strides = [1, 1]} : vector<6x32xf32> to vector<1x32xf32>
    %5 = vector.extract_strided_slice %0 {offsets = [4, 0], sizes = [1, 32], strides = [1, 1]} : vector<6x32xf32> to vector<1x32xf32>
    %6 = vector.extract_strided_slice %0 {offsets = [5, 0], sizes = [1, 32], strides = [1, 1]} : vector<6x32xf32> to vector<1x32xf32>
    %c0_1 = arith.constant 0 : index
    %c0_2 = arith.constant 0 : index
    %c0_3 = arith.constant 0 : index
    %7 = vector.load %arg1[%c0_1, %c0_2, %c0_3] : memref<1x8x32xf32, #tpu.memory_space<vmem>>, vector<1x8x32xf32>
    %8 = vector.shape_cast %7 : vector<1x8x32xf32> to vector<8x32xf32>
    %cst = arith.constant dense<0.000000e+00> : vector<8xf32>
    %9 = vector.multi_reduction <add>, %8, %cst [1] : vector<8x32xf32> to vector<8xf32>
    %10 = vector.shape_cast %9 : vector<8xf32> to vector<8x1xf32>
    %cst_4 = arith.constant 3.200000e+01 : f32
    %11 = vector.broadcast %cst_4 : f32 to vector<8x1xf32>
    %12 = arith.divf %10, %11 : vector<8x1xf32>
    %13 = vector.broadcast %12 : vector<8x1xf32> to vector<8x32xf32>
    %14 = arith.subf %8, %13 : vector<8x32xf32>
    %15 = arith.mulf %14, %14 : vector<8x32xf32>
    %cst_5 = arith.constant dense<0.000000e+00> : vector<8xf32>
    %16 = vector.multi_reduction <add>, %15, %cst_5 [1] : vector<8x32xf32> to vector<8xf32>
    %17 = vector.shape_cast %16 : vector<8xf32> to vector<8x1xf32>
    %cst_6 = arith.constant 3.200000e+01 : f32
    %18 = vector.broadcast %cst_6 : f32 to vector<8x1xf32>
    %19 = arith.divf %17, %18 : vector<8x1xf32>
    %cst_7 = arith.constant 9.99999974E-6 : f32
    %20 = vector.broadcast %cst_7 : f32 to vector<8x1xf32>
    %21 = arith.addf %19, %20 : vector<8x1xf32>
    %22 = math.rsqrt %21 : vector<8x1xf32>
    %23 = vector.broadcast %22 : vector<8x1xf32> to vector<8x32xf32>
    %24 = arith.mulf %14, %23 : vector<8x32xf32>
    %25 = vector.broadcast %1 : vector<1x32xf32> to vector<8x32xf32>
    %26 = arith.mulf %24, %25 : vector<8x32xf32>
    %27 = vector.broadcast %2 : vector<1x32xf32> to vector<8x32xf32>
    %28 = arith.addf %26, %27 : vector<8x32xf32>
    %29 = arith.truncf %28 : vector<8x32xf32> to vector<8x32xbf16>
    %c0_8 = arith.constant 0 : index
    %c0_9 = arith.constant 0 : index
    %30 = vector.load %arg3[%c0_8, %c0_9] : memref<12x8xf32, #tpu.memory_space<vmem>>, vector<12x8xf32>
    %cst_10 = arith.constant 0.000000e+00 : f32
    %31 = vector.broadcast %cst_10 : f32 to vector<8x32xf32>
    %c0_11 = arith.constant 0 : index
    %c0_12 = arith.constant 0 : index
    %c0_13 = arith.constant 0 : index
    %32 = vector.load %arg5[%c0_11, %c0_12, %c0_13] : memref<12x32x8xbf16, #tpu.memory_space<vmem>>, vector<1x32x8xbf16>
    %33 = vector.shape_cast %32 : vector<1x32x8xbf16> to vector<32x8xbf16>
    %cst_14 = arith.constant dense<0.000000e+00> : vector<8x8xf32>
    %34 = tpu.matmul %29, %33, %cst_14 {dimension_numbers = #tpu.dot_dimension_numbers<[1], [0], [0], [1], [0, 0, 1, 1], [], []>} : vector<8x32xbf16>, vector<32x8xbf16>, vector<8x8xf32> -> vector<8x8xf32>
    %35 = vector.extract_strided_slice %30 {offsets = [0, 0], sizes = [1, 8], strides = [1, 1]} : vector<12x8xf32> to vector<1x8xf32>
    %36 = vector.broadcast %35 : vector<1x8xf32> to vector<8x8xf32>
    %37 = arith.addf %34, %36 : vector<8x8xf32>
    %c4 = arith.constant 4 : index
    %c0_15 = arith.constant 0 : index
    %c0_16 = arith.constant 0 : index
    %38 = vector.load %arg5[%c4, %c0_15, %c0_16] : memref<12x32x8xbf16, #tpu.memory_space<vmem>>, vector<1x32x8xbf16>
    %39 = vector.shape_cast %38 : vector<1x32x8xbf16> to vector<32x8xbf16>
    %cst_17 = arith.constant dense<0.000000e+00> : vector<8x8xf32>
    %40 = tpu.matmul %29, %39, %cst_17 {dimension_numbers = #tpu.dot_dimension_numbers<[1], [0], [0], [1], [0, 0, 1, 1], [], []>} : vector<8x32xbf16>, vector<32x8xbf16>, vector<8x8xf32> -> vector<8x8xf32>
    %41 = vector.extract_strided_slice %30 {offsets = [4, 0], sizes = [1, 8], strides = [1, 1]} : vector<12x8xf32> to vector<1x8xf32>
    %42 = vector.broadcast %41 : vector<1x8xf32> to vector<8x8xf32>
    %43 = arith.addf %40, %42 : vector<8x8xf32>
    %c8 = arith.constant 8 : index
    %c0_18 = arith.constant 0 : index
    %c0_19 = arith.constant 0 : index
    %44 = vector.load %arg5[%c8, %c0_18, %c0_19] : memref<12x32x8xbf16, #tpu.memory_space<vmem>>, vector<1x32x8xbf16>
    %45 = vector.shape_cast %44 : vector<1x32x8xbf16> to vector<32x8xbf16>
    %cst_20 = arith.constant dense<0.000000e+00> : vector<8x8xf32>
    %46 = tpu.matmul %29, %45, %cst_20 {dimension_numbers = #tpu.dot_dimension_numbers<[1], [0], [0], [1], [0, 0, 1, 1], [], []>} : vector<8x32xbf16>, vector<32x8xbf16>, vector<8x8xf32> -> vector<8x8xf32>
    %47 = vector.extract_strided_slice %30 {offsets = [8, 0], sizes = [1, 8], strides = [1, 1]} : vector<12x8xf32> to vector<1x8xf32>
    %48 = vector.broadcast %47 : vector<1x8xf32> to vector<8x8xf32>
    %49 = arith.addf %46, %48 : vector<8x8xf32>
    %cst_21 = arith.constant dense<0.000000e+00> : vector<8x8xf32>
    %50 = tpu.matmul %37, %43, %cst_21 {dimension_numbers = #tpu.dot_dimension_numbers<[1], [1], [0], [0], [0, 0, 1, 0], [], []>} : vector<8x8xf32>, vector<8x8xf32>, vector<8x8xf32> -> vector<8x8xf32>
    %cst_22 = arith.constant dense<0xFF800000> : vector<8xf32>
    %51 = vector.multi_reduction <maximumf>, %50, %cst_22 [1] : vector<8x8xf32> to vector<8xf32>
    %52 = vector.shape_cast %51 : vector<8xf32> to vector<8x1xf32>
    %53 = vector.broadcast %52 : vector<8x1xf32> to vector<8x8xf32>
    %54 = arith.subf %50, %53 : vector<8x8xf32>
    %55 = math.exp %54 : vector<8x8xf32>
    %cst_23 = arith.constant dense<0.000000e+00> : vector<8xf32>
    %56 = vector.multi_reduction <add>, %55, %cst_23 [1] : vector<8x8xf32> to vector<8xf32>
    %57 = vector.shape_cast %56 : vector<8xf32> to vector<8x1xf32>
    %58 = tpu.reciprocal %57 {approx = true} : vector<8x1xf32> -> vector<8x1xf32>
    %59 = vector.broadcast %58 : vector<8x1xf32> to vector<8x8xf32>
    %60 = arith.mulf %55, %59 : vector<8x8xf32>
    %cst_24 = arith.constant dense<0.000000e+00> : vector<8x8xf32>
    %61 = tpu.matmul %60, %49, %cst_24 {dimension_numbers = #tpu.dot_dimension_numbers<[1], [0], [0], [1], [0, 0, 1, 1], [], []>} : vector<8x8xf32>, vector<8x8xf32>, vector<8x8xf32> -> vector<8x8xf32>
    %62 = arith.truncf %61 : vector<8x8xf32> to vector<8x8xbf16>
    %c0_25 = arith.constant 0 : index
    %c0_26 = arith.constant 0 : index
    %c0_27 = arith.constant 0 : index
    %63 = vector.load %arg6[%c0_25, %c0_26, %c0_27] : memref<4x8x32xbf16, #tpu.memory_space<vmem>>, vector<1x8x32xbf16>
    %64 = vector.shape_cast %63 : vector<1x8x32xbf16> to vector<8x32xbf16>
    %cst_28 = arith.constant dense<0.000000e+00> : vector<8x32xf32>
    %65 = tpu.matmul %62, %64, %cst_28 {dimension_numbers = #tpu.dot_dimension_numbers<[1], [0], [0], [1], [0, 0, 1, 1], [], []>} : vector<8x8xbf16>, vector<8x32xbf16>, vector<8x32xf32> -> vector<8x32xf32>
    %66 = arith.addf %31, %65 : vector<8x32xf32>
    %c1 = arith.constant 1 : index
    %c0_29 = arith.constant 0 : index
    %c0_30 = arith.constant 0 : index
    %67 = vector.load %arg5[%c1, %c0_29, %c0_30] : memref<12x32x8xbf16, #tpu.memory_space<vmem>>, vector<1x32x8xbf16>
    %68 = vector.shape_cast %67 : vector<1x32x8xbf16> to vector<32x8xbf16>
    %cst_31 = arith.constant dense<0.000000e+00> : vector<8x8xf32>
    %69 = tpu.matmul %29, %68, %cst_31 {dimension_numbers = #tpu.dot_dimension_numbers<[1], [0], [0], [1], [0, 0, 1, 1], [], []>} : vector<8x32xbf16>, vector<32x8xbf16>, vector<8x8xf32> -> vector<8x8xf32>
    %70 = vector.extract_strided_slice %30 {offsets = [1, 0], sizes = [1, 8], strides = [1, 1]} : vector<12x8xf32> to vector<1x8xf32>
    %71 = vector.broadcast %70 : vector<1x8xf32> to vector<8x8xf32>
    %72 = arith.addf %69, %71 : vector<8x8xf32>
    %c5 = arith.constant 5 : index
    %c0_32 = arith.constant 0 : index
    %c0_33 = arith.constant 0 : index
    %73 = vector.load %arg5[%c5, %c0_32, %c0_33] : memref<12x32x8xbf16, #tpu.memory_space<vmem>>, vector<1x32x8xbf16>
    %74 = vector.shape_cast %73 : vector<1x32x8xbf16> to vector<32x8xbf16>
    %cst_34 = arith.constant dense<0.000000e+00> : vector<8x8xf32>
    %75 = tpu.matmul %29, %74, %cst_34 {dimension_numbers = #tpu.dot_dimension_numbers<[1], [0], [0], [1], [0, 0, 1, 1], [], []>} : vector<8x32xbf16>, vector<32x8xbf16>, vector<8x8xf32> -> vector<8x8xf32>
    %76 = vector.extract_strided_slice %30 {offsets = [5, 0], sizes = [1, 8], strides = [1, 1]} : vector<12x8xf32> to vector<1x8xf32>
    %77 = vector.broadcast %76 : vector<1x8xf32> to vector<8x8xf32>
    %78 = arith.addf %75, %77 : vector<8x8xf32>
    %c9 = arith.constant 9 : index
    %c0_35 = arith.constant 0 : index
    %c0_36 = arith.constant 0 : index
    %79 = vector.load %arg5[%c9, %c0_35, %c0_36] : memref<12x32x8xbf16, #tpu.memory_space<vmem>>, vector<1x32x8xbf16>
    %80 = vector.shape_cast %79 : vector<1x32x8xbf16> to vector<32x8xbf16>
    %cst_37 = arith.constant dense<0.000000e+00> : vector<8x8xf32>
    %81 = tpu.matmul %29, %80, %cst_37 {dimension_numbers = #tpu.dot_dimension_numbers<[1], [0], [0], [1], [0, 0, 1, 1], [], []>} : vector<8x32xbf16>, vector<32x8xbf16>, vector<8x8xf32> -> vector<8x8xf32>
    %82 = vector.extract_strided_slice %30 {offsets = [9, 0], sizes = [1, 8], strides = [1, 1]} : vector<12x8xf32> to vector<1x8xf32>
    %83 = vector.broadcast %82 : vector<1x8xf32> to vector<8x8xf32>
    %84 = arith.addf %81, %83 : vector<8x8xf32>
    %cst_38 = arith.constant dense<0.000000e+00> : vector<8x8xf32>
    %85 = tpu.matmul %72, %78, %cst_38 {dimension_numbers = #tpu.dot_dimension_numbers<[1], [1], [0], [0], [0, 0, 1, 0], [], []>} : vector<8x8xf32>, vector<8x8xf32>, vector<8x8xf32> -> vector<8x8xf32>
    %cst_39 = arith.constant dense<0xFF800000> : vector<8xf32>
    %86 = vector.multi_reduction <maximumf>, %85, %cst_39 [1] : vector<8x8xf32> to vector<8xf32>
    %87 = vector.shape_cast %86 : vector<8xf32> to vector<8x1xf32>
    %88 = vector.broadcast %87 : vector<8x1xf32> to vector<8x8xf32>
    %89 = arith.subf %85, %88 : vector<8x8xf32>
    %90 = math.exp %89 : vector<8x8xf32>
    %cst_40 = arith.constant dense<0.000000e+00> : vector<8xf32>
    %91 = vector.multi_reduction <add>, %90, %cst_40 [1] : vector<8x8xf32> to vector<8xf32>
    %92 = vector.shape_cast %91 : vector<8xf32> to vector<8x1xf32>
    %93 = tpu.reciprocal %92 {approx = true} : vector<8x1xf32> -> vector<8x1xf32>
    %94 = vector.broadcast %93 : vector<8x1xf32> to vector<8x8xf32>
    %95 = arith.mulf %90, %94 : vector<8x8xf32>
    %cst_41 = arith.constant dense<0.000000e+00> : vector<8x8xf32>
    %96 = tpu.matmul %95, %84, %cst_41 {dimension_numbers = #tpu.dot_dimension_numbers<[1], [0], [0], [1], [0, 0, 1, 1], [], []>} : vector<8x8xf32>, vector<8x8xf32>, vector<8x8xf32> -> vector<8x8xf32>
    %97 = arith.truncf %96 : vector<8x8xf32> to vector<8x8xbf16>
    %c1_42 = arith.constant 1 : index
    %c0_43 = arith.constant 0 : index
    %c0_44 = arith.constant 0 : index
    %98 = vector.load %arg6[%c1_42, %c0_43, %c0_44] : memref<4x8x32xbf16, #tpu.memory_space<vmem>>, vector<1x8x32xbf16>
    %99 = vector.shape_cast %98 : vector<1x8x32xbf16> to vector<8x32xbf16>
    %cst_45 = arith.constant dense<0.000000e+00> : vector<8x32xf32>
    %100 = tpu.matmul %97, %99, %cst_45 {dimension_numbers = #tpu.dot_dimension_numbers<[1], [0], [0], [1], [0, 0, 1, 1], [], []>} : vector<8x8xbf16>, vector<8x32xbf16>, vector<8x32xf32> -> vector<8x32xf32>
    %101 = arith.addf %66, %100 : vector<8x32xf32>
    %c2 = arith.constant 2 : index
    %c0_46 = arith.constant 0 : index
    %c0_47 = arith.constant 0 : index
    %102 = vector.load %arg5[%c2, %c0_46, %c0_47] : memref<12x32x8xbf16, #tpu.memory_space<vmem>>, vector<1x32x8xbf16>
    %103 = vector.shape_cast %102 : vector<1x32x8xbf16> to vector<32x8xbf16>
    %cst_48 = arith.constant dense<0.000000e+00> : vector<8x8xf32>
    %104 = tpu.matmul %29, %103, %cst_48 {dimension_numbers = #tpu.dot_dimension_numbers<[1], [0], [0], [1], [0, 0, 1, 1], [], []>} : vector<8x32xbf16>, vector<32x8xbf16>, vector<8x8xf32> -> vector<8x8xf32>
    %105 = vector.extract_strided_slice %30 {offsets = [2, 0], sizes = [1, 8], strides = [1, 1]} : vector<12x8xf32> to vector<1x8xf32>
    %106 = vector.broadcast %105 : vector<1x8xf32> to vector<8x8xf32>
    %107 = arith.addf %104, %106 : vector<8x8xf32>
    %c6 = arith.constant 6 : index
    %c0_49 = arith.constant 0 : index
    %c0_50 = arith.constant 0 : index
    %108 = vector.load %arg5[%c6, %c0_49, %c0_50] : memref<12x32x8xbf16, #tpu.memory_space<vmem>>, vector<1x32x8xbf16>
    %109 = vector.shape_cast %108 : vector<1x32x8xbf16> to vector<32x8xbf16>
    %cst_51 = arith.constant dense<0.000000e+00> : vector<8x8xf32>
    %110 = tpu.matmul %29, %109, %cst_51 {dimension_numbers = #tpu.dot_dimension_numbers<[1], [0], [0], [1], [0, 0, 1, 1], [], []>} : vector<8x32xbf16>, vector<32x8xbf16>, vector<8x8xf32> -> vector<8x8xf32>
    %111 = vector.extract_strided_slice %30 {offsets = [6, 0], sizes = [1, 8], strides = [1, 1]} : vector<12x8xf32> to vector<1x8xf32>
    %112 = vector.broadcast %111 : vector<1x8xf32> to vector<8x8xf32>
    %113 = arith.addf %110, %112 : vector<8x8xf32>
    %c10 = arith.constant 10 : index
    %c0_52 = arith.constant 0 : index
    %c0_53 = arith.constant 0 : index
    %114 = vector.load %arg5[%c10, %c0_52, %c0_53] : memref<12x32x8xbf16, #tpu.memory_space<vmem>>, vector<1x32x8xbf16>
    %115 = vector.shape_cast %114 : vector<1x32x8xbf16> to vector<32x8xbf16>
    %cst_54 = arith.constant dense<0.000000e+00> : vector<8x8xf32>
    %116 = tpu.matmul %29, %115, %cst_54 {dimension_numbers = #tpu.dot_dimension_numbers<[1], [0], [0], [1], [0, 0, 1, 1], [], []>} : vector<8x32xbf16>, vector<32x8xbf16>, vector<8x8xf32> -> vector<8x8xf32>
    %117 = vector.extract_strided_slice %30 {offsets = [10, 0], sizes = [1, 8], strides = [1, 1]} : vector<12x8xf32> to vector<1x8xf32>
    %118 = vector.broadcast %117 : vector<1x8xf32> to vector<8x8xf32>
    %119 = arith.addf %116, %118 : vector<8x8xf32>
    %cst_55 = arith.constant dense<0.000000e+00> : vector<8x8xf32>
    %120 = tpu.matmul %107, %113, %cst_55 {dimension_numbers = #tpu.dot_dimension_numbers<[1], [1], [0], [0], [0, 0, 1, 0], [], []>} : vector<8x8xf32>, vector<8x8xf32>, vector<8x8xf32> -> vector<8x8xf32>
    %cst_56 = arith.constant dense<0xFF800000> : vector<8xf32>
    %121 = vector.multi_reduction <maximumf>, %120, %cst_56 [1] : vector<8x8xf32> to vector<8xf32>
    %122 = vector.shape_cast %121 : vector<8xf32> to vector<8x1xf32>
    %123 = vector.broadcast %122 : vector<8x1xf32> to vector<8x8xf32>
    %124 = arith.subf %120, %123 : vector<8x8xf32>
    %125 = math.exp %124 : vector<8x8xf32>
    %cst_57 = arith.constant dense<0.000000e+00> : vector<8xf32>
    %126 = vector.multi_reduction <add>, %125, %cst_57 [1] : vector<8x8xf32> to vector<8xf32>
    %127 = vector.shape_cast %126 : vector<8xf32> to vector<8x1xf32>
    %128 = tpu.reciprocal %127 {approx = true} : vector<8x1xf32> -> vector<8x1xf32>
    %129 = vector.broadcast %128 : vector<8x1xf32> to vector<8x8xf32>
    %130 = arith.mulf %125, %129 : vector<8x8xf32>
    %cst_58 = arith.constant dense<0.000000e+00> : vector<8x8xf32>
    %131 = tpu.matmul %130, %119, %cst_58 {dimension_numbers = #tpu.dot_dimension_numbers<[1], [0], [0], [1], [0, 0, 1, 1], [], []>} : vector<8x8xf32>, vector<8x8xf32>, vector<8x8xf32> -> vector<8x8xf32>
    %132 = arith.truncf %131 : vector<8x8xf32> to vector<8x8xbf16>
    %c2_59 = arith.constant 2 : index
    %c0_60 = arith.constant 0 : index
    %c0_61 = arith.constant 0 : index
    %133 = vector.load %arg6[%c2_59, %c0_60, %c0_61] : memref<4x8x32xbf16, #tpu.memory_space<vmem>>, vector<1x8x32xbf16>
    %134 = vector.shape_cast %133 : vector<1x8x32xbf16> to vector<8x32xbf16>
    %cst_62 = arith.constant dense<0.000000e+00> : vector<8x32xf32>
    %135 = tpu.matmul %132, %134, %cst_62 {dimension_numbers = #tpu.dot_dimension_numbers<[1], [0], [0], [1], [0, 0, 1, 1], [], []>} : vector<8x8xbf16>, vector<8x32xbf16>, vector<8x32xf32> -> vector<8x32xf32>
    %136 = arith.addf %101, %135 : vector<8x32xf32>
    %c3 = arith.constant 3 : index
    %c0_63 = arith.constant 0 : index
    %c0_64 = arith.constant 0 : index
    %137 = vector.load %arg5[%c3, %c0_63, %c0_64] : memref<12x32x8xbf16, #tpu.memory_space<vmem>>, vector<1x32x8xbf16>
    %138 = vector.shape_cast %137 : vector<1x32x8xbf16> to vector<32x8xbf16>
    %cst_65 = arith.constant dense<0.000000e+00> : vector<8x8xf32>
    %139 = tpu.matmul %29, %138, %cst_65 {dimension_numbers = #tpu.dot_dimension_numbers<[1], [0], [0], [1], [0, 0, 1, 1], [], []>} : vector<8x32xbf16>, vector<32x8xbf16>, vector<8x8xf32> -> vector<8x8xf32>
    %140 = vector.extract_strided_slice %30 {offsets = [3, 0], sizes = [1, 8], strides = [1, 1]} : vector<12x8xf32> to vector<1x8xf32>
    %141 = vector.broadcast %140 : vector<1x8xf32> to vector<8x8xf32>
    %142 = arith.addf %139, %141 : vector<8x8xf32>
    %c7 = arith.constant 7 : index
    %c0_66 = arith.constant 0 : index
    %c0_67 = arith.constant 0 : index
    %143 = vector.load %arg5[%c7, %c0_66, %c0_67] : memref<12x32x8xbf16, #tpu.memory_space<vmem>>, vector<1x32x8xbf16>
    %144 = vector.shape_cast %143 : vector<1x32x8xbf16> to vector<32x8xbf16>
    %cst_68 = arith.constant dense<0.000000e+00> : vector<8x8xf32>
    %145 = tpu.matmul %29, %144, %cst_68 {dimension_numbers = #tpu.dot_dimension_numbers<[1], [0], [0], [1], [0, 0, 1, 1], [], []>} : vector<8x32xbf16>, vector<32x8xbf16>, vector<8x8xf32> -> vector<8x8xf32>
    %146 = vector.extract_strided_slice %30 {offsets = [7, 0], sizes = [1, 8], strides = [1, 1]} : vector<12x8xf32> to vector<1x8xf32>
    %147 = vector.broadcast %146 : vector<1x8xf32> to vector<8x8xf32>
    %148 = arith.addf %145, %147 : vector<8x8xf32>
    %c11 = arith.constant 11 : index
    %c0_69 = arith.constant 0 : index
    %c0_70 = arith.constant 0 : index
    %149 = vector.load %arg5[%c11, %c0_69, %c0_70] : memref<12x32x8xbf16, #tpu.memory_space<vmem>>, vector<1x32x8xbf16>
    %150 = vector.shape_cast %149 : vector<1x32x8xbf16> to vector<32x8xbf16>
    %cst_71 = arith.constant dense<0.000000e+00> : vector<8x8xf32>
    %151 = tpu.matmul %29, %150, %cst_71 {dimension_numbers = #tpu.dot_dimension_numbers<[1], [0], [0], [1], [0, 0, 1, 1], [], []>} : vector<8x32xbf16>, vector<32x8xbf16>, vector<8x8xf32> -> vector<8x8xf32>
    %152 = vector.extract_strided_slice %30 {offsets = [11, 0], sizes = [1, 8], strides = [1, 1]} : vector<12x8xf32> to vector<1x8xf32>
    %153 = vector.broadcast %152 : vector<1x8xf32> to vector<8x8xf32>
    %154 = arith.addf %151, %153 : vector<8x8xf32>
    %cst_72 = arith.constant dense<0.000000e+00> : vector<8x8xf32>
    %155 = tpu.matmul %142, %148, %cst_72 {dimension_numbers = #tpu.dot_dimension_numbers<[1], [1], [0], [0], [0, 0, 1, 0], [], []>} : vector<8x8xf32>, vector<8x8xf32>, vector<8x8xf32> -> vector<8x8xf32>
    %cst_73 = arith.constant dense<0xFF800000> : vector<8xf32>
    %156 = vector.multi_reduction <maximumf>, %155, %cst_73 [1] : vector<8x8xf32> to vector<8xf32>
    %157 = vector.shape_cast %156 : vector<8xf32> to vector<8x1xf32>
    %158 = vector.broadcast %157 : vector<8x1xf32> to vector<8x8xf32>
    %159 = arith.subf %155, %158 : vector<8x8xf32>
    %160 = math.exp %159 : vector<8x8xf32>
    %cst_74 = arith.constant dense<0.000000e+00> : vector<8xf32>
    %161 = vector.multi_reduction <add>, %160, %cst_74 [1] : vector<8x8xf32> to vector<8xf32>
    %162 = vector.shape_cast %161 : vector<8xf32> to vector<8x1xf32>
    %163 = tpu.reciprocal %162 {approx = true} : vector<8x1xf32> -> vector<8x1xf32>
    %164 = vector.broadcast %163 : vector<8x1xf32> to vector<8x8xf32>
    %165 = arith.mulf %160, %164 : vector<8x8xf32>
    %cst_75 = arith.constant dense<0.000000e+00> : vector<8x8xf32>
    %166 = tpu.matmul %165, %154, %cst_75 {dimension_numbers = #tpu.dot_dimension_numbers<[1], [0], [0], [1], [0, 0, 1, 1], [], []>} : vector<8x8xf32>, vector<8x8xf32>, vector<8x8xf32> -> vector<8x8xf32>
    %167 = arith.truncf %166 : vector<8x8xf32> to vector<8x8xbf16>
    %c3_76 = arith.constant 3 : index
    %c0_77 = arith.constant 0 : index
    %c0_78 = arith.constant 0 : index
    %168 = vector.load %arg6[%c3_76, %c0_77, %c0_78] : memref<4x8x32xbf16, #tpu.memory_space<vmem>>, vector<1x8x32xbf16>
    %169 = vector.shape_cast %168 : vector<1x8x32xbf16> to vector<8x32xbf16>
    %cst_79 = arith.constant dense<0.000000e+00> : vector<8x32xf32>
    %170 = tpu.matmul %167, %169, %cst_79 {dimension_numbers = #tpu.dot_dimension_numbers<[1], [0], [0], [1], [0, 0, 1, 1], [], []>} : vector<8x8xbf16>, vector<8x32xbf16>, vector<8x32xf32> -> vector<8x32xf32>
    %171 = arith.addf %136, %170 : vector<8x32xf32>
    %172 = arith.addf %28, %171 : vector<8x32xf32>
    %173 = vector.broadcast %3 : vector<1x32xf32> to vector<8x32xf32>
    %174 = arith.addf %172, %173 : vector<8x32xf32>
    %cst_80 = arith.constant dense<0.000000e+00> : vector<8xf32>
    %175 = vector.multi_reduction <add>, %174, %cst_80 [1] : vector<8x32xf32> to vector<8xf32>
    %176 = vector.shape_cast %175 : vector<8xf32> to vector<8x1xf32>
    %cst_81 = arith.constant 3.200000e+01 : f32
    %177 = vector.broadcast %cst_81 : f32 to vector<8x1xf32>
    %178 = arith.divf %176, %177 : vector<8x1xf32>
    %179 = vector.broadcast %178 : vector<8x1xf32> to vector<8x32xf32>
    %180 = arith.subf %174, %179 : vector<8x32xf32>
    %181 = arith.mulf %180, %180 : vector<8x32xf32>
    %cst_82 = arith.constant dense<0.000000e+00> : vector<8xf32>
    %182 = vector.multi_reduction <add>, %181, %cst_82 [1] : vector<8x32xf32> to vector<8xf32>
    %183 = vector.shape_cast %182 : vector<8xf32> to vector<8x1xf32>
    %cst_83 = arith.constant 3.200000e+01 : f32
    %184 = vector.broadcast %cst_83 : f32 to vector<8x1xf32>
    %185 = arith.divf %183, %184 : vector<8x1xf32>
    %cst_84 = arith.constant 9.99999974E-6 : f32
    %186 = vector.broadcast %cst_84 : f32 to vector<8x1xf32>
    %187 = arith.addf %185, %186 : vector<8x1xf32>
    %188 = math.rsqrt %187 : vector<8x1xf32>
    %189 = vector.broadcast %188 : vector<8x1xf32> to vector<8x32xf32>
    %190 = arith.mulf %180, %189 : vector<8x32xf32>
    %191 = vector.broadcast %4 : vector<1x32xf32> to vector<8x32xf32>
    %192 = arith.mulf %190, %191 : vector<8x32xf32>
    %193 = vector.broadcast %5 : vector<1x32xf32> to vector<8x32xf32>
    %194 = arith.addf %192, %193 : vector<8x32xf32>
    %195 = arith.truncf %194 : vector<8x32xf32> to vector<8x32xbf16>
    %c0_85 = arith.constant 0 : index
    %c0_86 = arith.constant 0 : index
    %196 = vector.load %arg7[%c0_85, %c0_86] : memref<32x128xbf16, #tpu.memory_space<vmem>>, vector<32x128xbf16>
    %cst_87 = arith.constant dense<0.000000e+00> : vector<8x128xf32>
    %197 = tpu.matmul %195, %196, %cst_87 {dimension_numbers = #tpu.dot_dimension_numbers<[1], [0], [0], [1], [0, 0, 1, 1], [], []>} : vector<8x32xbf16>, vector<32x128xbf16>, vector<8x128xf32> -> vector<8x128xf32>
    %c0_88 = arith.constant 0 : index
    %c0_89 = arith.constant 0 : index
    %198 = vector.load %arg4[%c0_88, %c0_89] : memref<1x128xf32, #tpu.memory_space<vmem>>, vector<1x128xf32>
    %199 = vector.broadcast %198 : vector<1x128xf32> to vector<8x128xf32>
    %200 = arith.addf %197, %199 : vector<8x128xf32>
    %cst_90 = arith.constant 1.702000e+00 : f32
    %201 = vector.broadcast %cst_90 : f32 to vector<8x128xf32>
    %202 = arith.mulf %201, %200 : vector<8x128xf32>
    %203 = arith.negf %202 : vector<8x128xf32>
    %204 = math.exp %203 : vector<8x128xf32>
    %cst_91 = arith.constant 1.000000e+00 : f32
    %205 = vector.broadcast %cst_91 : f32 to vector<8x128xf32>
    %206 = arith.addf %205, %204 : vector<8x128xf32>
    %207 = arith.divf %205, %206 : vector<8x128xf32>
    %208 = arith.mulf %200, %207 : vector<8x128xf32>
    %209 = arith.truncf %208 : vector<8x128xf32> to vector<8x128xbf16>
    %c0_92 = arith.constant 0 : index
    %c0_93 = arith.constant 0 : index
    %210 = vector.load %arg8[%c0_92, %c0_93] : memref<128x32xbf16, #tpu.memory_space<vmem>>, vector<128x32xbf16>
    %cst_94 = arith.constant dense<0.000000e+00> : vector<8x32xf32>
    %211 = tpu.matmul %209, %210, %cst_94 {dimension_numbers = #tpu.dot_dimension_numbers<[1], [0], [0], [1], [0, 0, 1, 1], [], []>} : vector<8x128xbf16>, vector<128x32xbf16>, vector<8x32xf32> -> vector<8x32xf32>
    %212 = vector.broadcast %6 : vector<1x32xf32> to vector<8x32xf32>
    %213 = arith.addf %211, %212 : vector<8x32xf32>
    %214 = arith.addf %174, %213 : vector<8x32xf32>
    %c0_95 = arith.constant 0 : index
    %c0_96 = arith.constant 0 : index
    %c0_97 = arith.constant 0 : index
    %215 = vector.load %arg9[%c0_95, %c0_96, %c0_97] : memref<1x8x32xf32, #tpu.memory_space<vmem>>, vector<1x8x32xf32>
    %216 = vector.shape_cast %215 : vector<1x8x32xf32> to vector<8x32xf32>
    %217 = vector.shape_cast %214 : vector<8x32xf32> to vector<1x8x32xf32>
    tpu.vector_store %arg9[%c0_95, %c0_96, %c0_97], %217 {strides = array<i32>} : memref<1x8x32xf32, #tpu.memory_space<vmem>>, vector<1x8x32xf32>,
    return
  }
  func.func @transform_0(%arg0: i32) -> (i32, i32, i32) {
    %c0_i32 = arith.constant 0 : i32
    %c0_i32_0 = arith.constant 0 : i32
    %c0_i32_1 = arith.constant 0 : i32
    return %arg0, %c0_i32, %c0_i32_0 : i32, i32, i32
  }
  func.func @transform_1(%arg0: i32) -> (i32, i32) {
    %c0_i32 = arith.constant 0 : i32
    %c0_i32_0 = arith.constant 0 : i32
    %c0_i32_1 = arith.constant 0 : i32
    return %c0_i32, %c0_i32_0 : i32, i32
  }
  func.func @transform_2(%arg0: i32) -> (i32, i32) {
    %c0_i32 = arith.constant 0 : i32
    %c0_i32_0 = arith.constant 0 : i32
    %c0_i32_1 = arith.constant 0 : i32
    return %c0_i32, %c0_i32_0 : i32, i32
  }
  func.func @transform_3(%arg0: i32) -> (i32, i32) {
    %c0_i32 = arith.constant 0 : i32
    %c0_i32_0 = arith.constant 0 : i32
    %c0_i32_1 = arith.constant 0 : i32
    return %c0_i32, %c0_i32_0 : i32, i32
  }
  func.func @transform_4(%arg0: i32) -> (i32, i32, i32) {
    %c0_i32 = arith.constant 0 : i32
    %c0_i32_0 = arith.constant 0 : i32
    %c0_i32_1 = arith.constant 0 : i32
    %c0_i32_2 = arith.constant 0 : i32
    return %c0_i32, %c0_i32_0, %c0_i32_1 : i32, i32, i32
  }
  func.func @transform_5(%arg0: i32) -> (i32, i32, i32) {
    %c0_i32 = arith.constant 0 : i32
    %c0_i32_0 = arith.constant 0 : i32
    %c0_i32_1 = arith.constant 0 : i32
    %c0_i32_2 = arith.constant 0 : i32
    return %c0_i32, %c0_i32_0, %c0_i32_1 : i32, i32, i32
  }
  func.func @transform_6(%arg0: i32) -> (i32, i32) {
    %c0_i32 = arith.constant 0 : i32
    %c0_i32_0 = arith.constant 0 : i32
    %c0_i32_1 = arith.constant 0 : i32
    return %c0_i32, %c0_i32_0 : i32, i32
  }
  func.func @transform_7(%arg0: i32) -> (i32, i32) {
    %c0_i32 = arith.constant 0 : i32
    %c0_i32_0 = arith.constant 0 : i32
    %c0_i32_1 = arith.constant 0 : i32
    return %c0_i32, %c0_i32_0 : i32, i32
  }
  func.func @transform_8(%arg0: i32) -> (i32, i32, i32) {
    %c0_i32 = arith.constant 0 : i32
    %c0_i32_0 = arith.constant 0 : i32
    %c0_i32_1 = arith.constant 0 : i32
    return %arg0, %c0_i32, %c0_i32_0 : i32, i32, i32
  }
}

</mosaic_0001>

<llo_original>
// kernel: residual_attention_block.1
$region0: #{residual_attention_block.1}
  #allocation0 [shape = 'u32[]', space=smem, size = 0x4, offset = 0x4, fixed_abs, tag = 'smem constant byte address 0x4 - core index']
  #allocation1 [shape = 'u32[144,128]{1,0:T(1,128)}', space=vmem, size = 0x12000, scoped, tag = 'internal scratch']
  %s0 = inlined_call_operand.vmem [shape: f32[2,8,32], index: 0, kind: input, shape index: {}]
  %s1 = inlined_call_operand.vmem [shape: f32[6,32], index: 1, kind: input, shape index: {}]
  %s2 = inlined_call_operand.vmem [shape: f32[12,8], index: 2, kind: input, shape index: {}]
  %s3 = inlined_call_operand.vmem [shape: f32[1,128], index: 3, kind: input, shape index: {}]
  %s4 = inlined_call_operand.vmem [shape: bf16[12,32,8], index: 4, kind: input, shape index: {}]
  %s5 = inlined_call_operand.vmem [shape: bf16[4,8,32], index: 5, kind: input, shape index: {}]
  %s6 = inlined_call_operand.vmem [shape: bf16[32,128], index: 6, kind: input, shape index: {}]
  %s7 = inlined_call_operand.vmem [shape: bf16[128,32], index: 7, kind: input, shape index: {}]
  %s8 = inlined_call_operand.vmem [shape: f32[2,8,32], index: 8, kind: output, shape index: {}]
  %s9 = sld [smem:[#allocation0]]
  $region65: #{residual_attention_block.1} parent=0
    _
  %s11 = ssub.s32 1, %s9
  %s12 = scalar_select 0, %s11, %s9
  loop: start=0, step=1, limit=4
  $region2: #{residual_attention_block.1} parent=0 // loop_pre_header
    _
  $region3: #{residual_attention_block.1} parent=0 // loop_header
    %s14 = sphi 0, %s18
    %p15 = scmp.ge.s32.totalorder %s14, 4
    %s24 = sphi 0, %s26
    %s27 = sphi 0, %s24
    %s28 = sphi 0, %s27
    %s44 = sphi 0, %s28
    %s48 = sphi 0, %s48
    %s50 = sphi 0, %s48
    %s51 = sphi 0, %s50
    %s65 = sphi 0, %s51
    %s69 = sphi 0, %s69
    %s71 = sphi 0, %s69
    %s72 = sphi 0, %s71
    %s86 = sphi 0, %s72
    %s90 = sphi 0, %s90
    %s92 = sphi 0, %s90
    %s93 = sphi 0, %s92
    %s107 = sphi 0, %s93
    %s111 = sphi 0, %s111
    %s113 = sphi 0, %s111
    %s114 = sphi 0, %s113
    %s128 = sphi 0, %s114
    %s132 = sphi 0, %s132
    %s134 = sphi 0, %s132
    %s135 = sphi 0, %s134
    %s149 = sphi 0, %s135
    %s153 = sphi 0, %s153
    %s155 = sphi 0, %s153
    %s156 = sphi 0, %s155
    %s170 = sphi 0, %s156
    %s174 = sphi 0, %s174
    %s176 = sphi 0, %s174
    %s177 = sphi 0, %s176
    %s191 = sphi 0, %s177
    %s197 = sphi 0, %s199
    %s200 = sphi 0, %s197
    %s201 = sphi 0, %s200
    %s217 = sphi 0, %s201
  $region4: #{residual_attention_block.1} parent=0 // loop_header_branch
    %17 = sbr.rel (%p15) target = $region8
  $region5: #{residual_attention_block.1} parent=0 // loop_body
    %s19 = ssub.s32 %s14, 1
    %s20 = ssub.s32 %s14, 2
    %s21 = sadd.s32 %s14, 1
    %s22 = ssub.s32 %s14, %s21
    %p23 = scmp.eq.s32.totalorder %s22, 0
    %s25 = sadd.s32 %s24, 1
    %s26 = scalar_select %p23, %s24, %s25
    %p29 = pneg %p23
    %p30 = scmp.eq.s32.totalorder %s14, 1
    %p31 = por %p29, %p30
    %p32 = scmp.ne.s32.totalorder %s24, %s27
    %p33 = scmp.eq.s32.totalorder %s14, 0
    %p34 = por %p32, %p33
    %p35 = scmp.ne.s32.totalorder %s24, %s27
    %p36 = scmp.eq.s32.totalorder %s19, 1
    %p37 = por %p35, %p36
    %p38 = scmp.ne.s32.totalorder %s27, %s28
    %p39 = scmp.eq.s32.totalorder %s19, 0
    %p40 = por %p38, %p39
    %p41 = scmp.ne.s32.totalorder %s27, %s28
    %p42 = scmp.eq.s32.totalorder %s20, 1
    %p43 = por %p41, %p42
    %p45 = scmp.ne.s32.totalorder %s28, %s44
    %p46 = scmp.eq.s32.totalorder %s20, 0
    %p47 = por %p45, %p46
    %s49 = sadd.s32 %s48, 1
    %p52 = scmp.eq.s32.totalorder %s14, 1
    %p53 = scmp.ne.s32.totalorder %s48, %s50
    %p54 = scmp.eq.s32.totalorder %s14, 0
    %p55 = por %p53, %p54
    %p56 = scmp.ne.s32.totalorder %s48, %s50
    %p57 = scmp.eq.s32.totalorder %s19, 1
    %p58 = por %p56, %p57
    %p59 = scmp.ne.s32.totalorder %s50, %s51
    %p60 = scmp.eq.s32.totalorder %s19, 0
    %p61 = por %p59, %p60
    %p62 = scmp.ne.s32.totalorder %s50, %s51
    %p63 = scmp.eq.s32.totalorder %s20, 1
    %p64 = por %p62, %p63
    %p66 = scmp.ne.s32.totalorder %s51, %s65
    %p67 = scmp.eq.s32.totalorder %s20, 0
    %p68 = por %p66, %p67
    %s70 = sadd.s32 %s69, 1
    %p73 = scmp.eq.s32.totalorder %s14, 1
    %p74 = scmp.ne.s32.totalorder %s69, %s71
    %p75 = scmp.eq.s32.totalorder %s14, 0
    %p76 = por %p74, %p75
    %p77 = scmp.ne.s32.totalorder %s69, %s71
    %p78 = scmp.eq.s32.totalorder %s19, 1
    %p79 = por %p77, %p78
    %p80 = scmp.ne.s32.totalorder %s71, %s72
    %p81 = scmp.eq.s32.totalorder %s19, 0
    %p82 = por %p80, %p81
    %p83 = scmp.ne.s32.totalorder %s71, %s72
    %p84 = scmp.eq.s32.totalorder %s20, 1
    %p85 = por %p83, %p84
    %p87 = scmp.ne.s32.totalorder %s72, %s86
    %p88 = scmp.eq.s32.totalorder %s20, 0
    %p89 = por %p87, %p88
    %s91 = sadd.s32 %s90, 1
    %p94 = scmp.eq.s32.totalorder %s14, 1
    %p95 = scmp.ne.s32.totalorder %s90, %s92
    %p96 = scmp.eq.s32.totalorder %s14, 0
    %p97 = por %p95, %p96
    %p98 = scmp.ne.s32.totalorder %s90, %s92
    %p99 = scmp.eq.s32.totalorder %s19, 1
    %p100 = por %p98, %p99
    %p101 = scmp.ne.s32.totalorder %s92, %s93
    %p102 = scmp.eq.s32.totalorder %s19, 0
    %p103 = por %p101, %p102
    %p104 = scmp.ne.s32.totalorder %s92, %s93
    %p105 = scmp.eq.s32.totalorder %s20, 1
    %p106 = por %p104, %p105
    %p108 = scmp.ne.s32.totalorder %s93, %s107
    %p109 = scmp.eq.s32.totalorder %s20, 0
    %p110 = por %p108, %p109
    %s112 = sadd.s32 %s111, 1
    %p115 = scmp.eq.s32.totalorder %s14, 1
    %p116 = scmp.ne.s32.totalorder %s111, %s113
    %p117 = scmp.eq.s32.totalorder %s14, 0
    %p118 = por %p116, %p117
    %p119 = scmp.ne.s32.totalorder %s111, %s113
    %p120 = scmp.eq.s32.totalorder %s19, 1
    %p121 = por %p119, %p120
    %p122 = scmp.ne.s32.totalorder %s113, %s114
    %p123 = scmp.eq.s32.totalorder %s19, 0
    %p124 = por %p122, %p123
    %p125 = scmp.ne.s32.totalorder %s113, %s114
    %p126 = scmp.eq.s32.totalorder %s20, 1
    %p127 = por %p125, %p126
    %p129 = scmp.ne.s32.totalorder %s114, %s128
    %p130 = scmp.eq.s32.totalorder %s20, 0
    %p131 = por %p129, %p130
    %s133 = sadd.s32 %s132, 1
    %p136 = scmp.eq.s32.totalorder %s14, 1
    %p137 = scmp.ne.s32.totalorder %s132, %s134
    %p138 = scmp.eq.s32.totalorder %s14, 0
    %p139 = por %p137, %p138
    %p140 = scmp.ne.s32.totalorder %s132, %s134
    %p141 = scmp.eq.s32.totalorder %s19, 1
    %p142 = por %p140, %p141
    %p143 = scmp.ne.s32.totalorder %s134, %s135
    %p144 = scmp.eq.s32.totalorder %s19, 0
    %p145 = por %p143, %p144
    %p146 = scmp.ne.s32.totalorder %s134, %s135
    %p147 = scmp.eq.s32.totalorder %s20, 1
    %p148 = por %p146, %p147
    %p150 = scmp.ne.s32.totalorder %s135, %s149
    %p151 = scmp.eq.s32.totalorder %s20, 0
    %p152 = por %p150, %p151
    %s154 = sadd.s32 %s153, 1
    %p157 = scmp.eq.s32.totalorder %s14, 1
    %p158 = scmp.ne.s32.totalorder %s153, %s155
    %p159 = scmp.eq.s32.totalorder %s14, 0
    %p160 = por %p158, %p159
    %p161 = scmp.ne.s32.totalorder %s153, %s155
    %p162 = scmp.eq.s32.totalorder %s19, 1
    %p163 = por %p161, %p162
    %p164 = scmp.ne.s32.totalorder %s155, %s156
    %p165 = scmp.eq.s32.totalorder %s19, 0
    %p166 = por %p164, %p165
    %p167 = scmp.ne.s32.totalorder %s155, %s156
    %p168 = scmp.eq.s32.totalorder %s20, 1
    %p169 = por %p167, %p168
    %p171 = scmp.ne.s32.totalorder %s156, %s170
    %p172 = scmp.eq.s32.totalorder %s20, 0
    %p173 = por %p171, %p172
    %s175 = sadd.s32 %s174, 1
    %p178 = scmp.eq.s32.totalorder %s14, 1
    %p179 = scmp.ne.s32.totalorder %s174, %s176
    %p180 = scmp.eq.s32.totalorder %s14, 0
    %p181 = por %p179, %p180
    %p182 = scmp.ne.s32.totalorder %s174, %s176
    %p183 = scmp.eq.s32.totalorder %s19, 1
    %p184 = por %p182, %p183
    %p185 = scmp.ne.s32.totalorder %s176, %s177
    %p186 = scmp.eq.s32.totalorder %s19, 0
    %p187 = por %p185, %p186
    %p188 = scmp.ne.s32.totalorder %s176, %s177
    %p189 = scmp.eq.s32.totalorder %s20, 1
    %p190 = por %p188, %p189
    %p192 = scmp.ne.s32.totalorder %s177, %s191
    %p193 = scmp.eq.s32.totalorder %s20, 0
    %p194 = por %p192, %p193
    %s195 = ssub.s32 %s14, %s21
    %p196 = scmp.eq.s32.totalorder %s195, 0
    %s198 = sadd.s32 %s197, 1
    %s199 = scalar_select %p196, %s197, %s198
    %p202 = pneg %p196
    %p203 = scmp.eq.s32.totalorder %s14, 1
    %p204 = por %p202, %p203
    %p205 = scmp.ne.s32.totalorder %s197, %s200
    %p206 = scmp.eq.s32.totalorder %s14, 0
    %p207 = por %p205, %p206
    %p208 = scmp.ne.s32.totalorder %s197, %s200
    %p209 = scmp.eq.s32.totalorder %s19, 1
    %p210 = por %p208, %p209
    %p211 = scmp.ne.s32.totalorder %s200, %s201
    %p212 = scmp.eq.s32.totalorder %s19, 0
    %p213 = por %p211, %p212
    %p214 = scmp.ne.s32.totalorder %s200, %s201
    %p215 = scmp.eq.s32.totalorder %s20, 1
    %p216 = por %p214, %p215
    %p218 = scmp.ne.s32.totalorder %s201, %s217
    %p219 = scmp.eq.s32.totalorder %s20, 0
    %p220 = por %p218, %p219
    %p221 = scmp.le.s32.totalorder 1, %s14
    %p222 = scmp.lt.s32.totalorder %s14, 3
    %p223 = pnand %p221, %p222
    %p224 = pneg %p223
    // Predicated region
    $region9: #{residual_attention_block.1} parent=5 // pred_check
      _
    $region10: #{residual_attention_block.1} parent=5 // pred_check_branch
      %226 = sbr.rel (%p223) target = $region12
    $region11: #{residual_attention_block.1} parent=5 // pred_region
      %s227 = ssub.s32 %s14, 1
      // Predicated region
      $region13: #{residual_attention_block.1} parent=11 // pred_check
        %p228 = pneg %p61
      $region14: #{residual_attention_block.1} parent=11 // pred_check_branch
        %230 = sbr.rel (%p228) target = $region16
      $region15: #{residual_attention_block.1} parent=11 // pred_region
        _
      $region16: #{residual_attention_block.1} parent=11 // pred_fallthru
        _
      // Predicated region
      $region17: #{residual_attention_block.1} parent=11 // pred_check
        %p231 = pneg %p82
      $region18: #{residual_attention_block.1} parent=11 // pred_check_branch
        %233 = sbr.rel (%p231) target = $region20
      $region19: #{residual_attention_block.1} parent=11 // pred_region
        _
      $region20: #{residual_attention_block.1} parent=11 // pred_fallthru
        _
      // Predicated region
      $region21: #{residual_attention_block.1} parent=11 // pred_check
        %p234 = pneg %p103
      $region22: #{residual_attention_block.1} parent=11 // pred_check_branch
        %236 = sbr.rel (%p234) target = $region24
      $region23: #{residual_attention_block.1} parent=11 // pred_region
        _
      $region24: #{residual_attention_block.1} parent=11 // pred_fallthru
        _
      // Predicated region
      $region25: #{residual_attention_block.1} parent=11 // pred_check
        %p237 = pneg %p124
      $region26: #{residual_attention_block.1} parent=11 // pred_check_branch
        %239 = sbr.rel (%p237) target = $region28
      $region27: #{residual_attention_block.1} parent=11 // pred_region
        _
      $region28: #{residual_attention_block.1} parent=11 // pred_fallthru
        _
      // Predicated region
      $region29: #{residual_attention_block.1} parent=11 // pred_check
        %p240 = pneg %p145
      $region30: #{residual_attention_block.1} parent=11 // pred_check_branch
        %242 = sbr.rel (%p240) target = $region32
      $region31: #{residual_attention_block.1} parent=11 // pred_region
        _
      $region32: #{residual_attention_block.1} parent=11 // pred_fallthru
        _
      // Predicated region
      $region33: #{residual_attention_block.1} parent=11 // pred_check
        %p243 = pneg %p166
      $region34: #{residual_attention_block.1} parent=11 // pred_check_branch
        %245 = sbr.rel (%p243) target = $region36
      $region35: #{residual_attention_block.1} parent=11 // pred_region
        _
      $region36: #{residual_attention_block.1} parent=11 // pred_fallthru
        _
      // Predicated region
      $region37: #{residual_attention_block.1} parent=11 // pred_check
        %p246 = pneg %p187
      $region38: #{residual_attention_block.1} parent=11 // pred_check_branch
        %248 = sbr.rel (%p246) target = $region40
      $region39: #{residual_attention_block.1} parent=11 // pred_region
        _
      $region40: #{residual_attention_block.1} parent=11 // pred_fallthru
        _
    $region12: #{residual_attention_block.1} parent=5 // pred_fallthru
      _
    %p249 = scmp.lt.s32.totalorder %s14, 2
    // Predicated region
    $region41: #{residual_attention_block.1} parent=5 // pred_check
      %p250 = pneg %p249
    $region42: #{residual_attention_block.1} parent=5 // pred_check_branch
      %252 = sbr.rel (%p250) target = $region44
    $region43: #{residual_attention_block.1} parent=5 // pred_region
      // Predicated region
      $region45: #{residual_attention_block.1} parent=43 // pred_check
        %p253 = pneg %p34
      $region46: #{residual_attention_block.1} parent=43 // pred_check_branch
        %255 = sbr.rel (%p253) target = $region48
      $region47: #{residual_attention_block.1} parent=43 // pred_region
        %p256 = scmp.lt.s32.totalorder %s14, 1
        %s257 = scalar_select %p256, %s14, 1
        %s258 = smul.addr %s257, 8
        %s259 = scalar_lea.vmem %s0, %s258
      $region48: #{residual_attention_block.1} parent=43 // pred_fallthru
        _
    $region44: #{residual_attention_block.1} parent=5 // pred_fallthru
      _
    %p260 = scmp.le.s32.totalorder 1, %s14
    %p261 = scmp.lt.s32.totalorder %s14, 3
    %p262 = pnand %p260, %p261
    %p263 = pneg %p262
    // Predicated region
    $region49: #{residual_attention_block.1} parent=5 // pred_check
      _
    $region50: #{residual_attention_block.1} parent=5 // pred_check_branch
      %265 = sbr.rel (%p262) target = $region52
    $region51: #{residual_attention_block.1} parent=5 // pred_region
      %s266 = ssub.s32 %s14, 1
      %p267 = scmp.lt.s32.totalorder %s19, 1
      %s268 = scalar_select %p267, %s19, 1
      %s269 = smul.addr %s268, 8
      %s270 = scalar_lea.vmem %s0, %s269
      %p271 = pneg %p40
      %p272 = pneg %p37
      %p273 = pneg %p61
      %p274 = pneg %p58
      %p275 = pneg %p82
      %p276 = pneg %p79
      %p277 = pneg %p103
      %p278 = pneg %p100
      %p279 = pneg %p124
      %p280 = pneg %p121
      %p281 = pneg %p145
      %p282 = pneg %p142
      %p283 = pneg %p166
      %p284 = pneg %p163
      %p285 = pneg %p187
      %p286 = pneg %p184
      %p287 = pneg %p213
      %p288 = pneg %p210
      %p289 = scmp.lt.s32.totalorder %s19, 1
      %s290 = scalar_select %p289, %s19, 1
      %s291 = smul.addr %s290, 8
      %s292 = scalar_lea.vmem %s8, %s291
      %p293 = scmp.lt.s32.totalorder %s19, 1
      %s294 = scalar_select %p293, %s19, 1
      %s295 = smul.addr %s294, 8
      %s296 = scalar_lea.vmem %s0, %s295
      %p297 = scmp.lt.s32.totalorder %s19, 1
      %s298 = scalar_select %p297, %s19, 1
      %s299 = smul.addr %s298, 8
      %s300 = scalar_lea.vmem %s8, %s299
      %v302 = vld [vmem:[%s1] sm:$0x3f]
      %v303 = vld [vmem:[%s296] sm:$0xff]
      %vm304 = vcmask 261120
      %v305 = vsel %vm304, %v303, 0.0
      %306 = vadd.xlane.f32.xlu0 %v305
      %v307 = vpop.xlane.xlu0 %306
      %v308 = vrcp.pop 32.0
      %v309 = vmul.f32 %v307, %v308
      %v310 = vsub.f32 %v303, %v309
      %v311 = vmul.f32 %v310, %v310
      %v312 = vsel %vm304, %v311, 0.0
      %313 = vadd.xlane.f32.xlu0 %v312
      %v314 = vpop.xlane.xlu0 %313
      %v315 = vmul.f32 %v314, %v308
      %v316 = vadd.f32 %v315, 1e-05
      %v317 = vrsqrt.pop %v316
      %v318 = vmul.f32 %v310, %v317
      %v319 = vlaneseq
      %v320 = vshrl.u32 %v319, 7
      %v321 = vsub.s32 0, %v320
      %v322 = vrot.slane %v302, %v321
      %v323 = vmul.f32 %v318, %v322
      %v324 = vlaneseq
      %v325 = vshrl.u32 %v324, 7
      %v326 = vsub.s32 1, %v325
      %v327 = vrot.slane %v302, %v326
      %v328 = vadd.f32 %v323, %v327
      %v329 = vpack.c.bf16 %v328, %v328
      %v330 = vld [vmem:[%s2] sm:$0xff]
      %v331 = vld [vmem:[%s2 + $0x8] sm:$0xf]
      %v332 = vld [vmem:[%s4] sm:$0xf]
      %v333 = vld [vmem:[%s4 + $0x4] sm:$0xf]
      %v334 = vld [vmem:[%s4 + $0x8] sm:$0xf]
      %v335 = vld [vmem:[%s4 + $0xc] sm:$0xf]
      %v336 = vlaneseq
      %v337 = vshrl.u32 %v336, 7
      %v338 = vsub.s32 0, %v337
      %v339 = vrot.slane %v330, %v338
      %v344 = vunpack.c.l.b16 %v332
      %v345 = vunpack.c.l.b16 %v333
      %v346 = vunpack.c.l.b16 %v334
      %v347 = vunpack.c.l.b16 %v335
      %v348 = vpack.c.b16 %v345, %v344
      %v349 = vpack.c.b16 %v347, %v346
      %v353 = vsel %vm304, %v329, 0
      %355 = vmatprep.subr.bf16.mxu0 0
      %356 = vmatpush1.bf16.msra.mxu0 %v348
      %357 = vmatprep.subr.bf16.mxu0 0
      %358 = vmatpush1.bf16.msra.mxu0 %v349
      %359 = vmatprep.subr.bf16.mxu0 0
      %360 = vmatpush1.bf16.msra.mxu0 0
      %361 = vmatprep.subr.bf16.mxu0 0
      %362 = vmatpush1.bf16.msra.mxu0 0
      %363 = vmatprep.subr.bf16.mxu0 0
      %364 = vmatpush1.bf16.msra.mxu0 0
      %365 = vmatprep.subr.bf16.mxu0 0
      %366 = vmatpush1.bf16.msra.mxu0 0
      %367 = vmatprep.subr.bf16.mxu0 0
      %368 = vmatpush1.bf16.msra.mxu0 0
      %369 = vmatprep.subr.bf16.mxu0 0
      %370 = vmatpush1.bf16.msra.mxu0 0
      %371 = vmatprep.subr.bf16.mxu0 0
      %372 = vmatpush1.bf16.msra.mxu0 0
      %373 = vmatprep.subr.bf16.mxu0 0
      %374 = vmatpush1.bf16.msra.mxu0 0
      %375 = vmatprep.subr.bf16.mxu0 0
      %376 = vmatpush1.bf16.msra.mxu0 0
      %377 = vmatprep.subr.bf16.mxu0 0
      %378 = vmatpush1.bf16.msra.mxu0 0
      %379 = vmatprep.subr.bf16.mxu0 0
      %380 = vmatpush1.bf16.msra.mxu0 0
      %381 = vmatprep.subr.bf16.mxu0 0
      %382 = vmatpush1.bf16.msra.mxu0 0
      %383 = vmatprep.subr.bf16.mxu0 0
      %384 = vmatpush1.bf16.msra.mxu0 0
      %385 = vmatprep.subr.bf16.mxu0 0
      %386 = vmatpush1.bf16.msra.mxu0 0
      %387 = vmatprep.mubr.bf16.mxu0 0
      %388 = vmatmul.mubr.bf16.gmra.mrb[0].mxu0 %v353
      %v389 = vpop.f32.mrb[0].mxu0
      %v390 = vadd.f32 %v339, %v389
      %v391 = vpop.f32.mrb[0].mxu0
      %v392 = vpop.f32.mrb[0].mxu0
      %v393 = vpop.f32.mrb[0].mxu0
      %394 = vdwg.mxu0
      %s395 = scalar_lea.vmem %s4, 64
      %v396 = vld [vmem:[%s395] sm:$0xf]
      %v397 = vld [vmem:[%s395 + $0x4] sm:$0xf]
      %v398 = vld [vmem:[%s395 + $0x8] sm:$0xf]
      %v399 = vld [vmem:[%s395 + $0xc] sm:$0xf]
      %v400 = vlaneseq
      %v401 = vshrl.u32 %v400, 7
      %v402 = vsub.s32 4, %v401
      %v403 = vrot.slane %v330, %v402
      %v408 = vunpack.c.l.b16 %v396
      %v409 = vunpack.c.l.b16 %v397
      %v410 = vunpack.c.l.b16 %v398
      %v411 = vunpack.c.l.b16 %v399
      %v412 = vpack.c.b16 %v409, %v408
      %v413 = vpack.c.b16 %v411, %v410
      %416 = vmatprep.subr.bf16.mxu0 0
      %417 = vmatpush1.bf16.msra.mxu0 %v412
      %418 = vmatprep.subr.bf16.mxu0 0
      %419 = vmatpush1.bf16.msra.mxu0 %v413
      %420 = vmatprep.subr.bf16.mxu0 0
      %421 = vmatpush1.bf16.msra.mxu0 0
      %422 = vmatprep.subr.bf16.mxu0 0
      %423 = vmatpush1.bf16.msra.mxu0 0
      %424 = vmatprep.subr.bf16.mxu0 0
      %425 = vmatpush1.bf16.msra.mxu0 0
      %426 = vmatprep.subr.bf16.mxu0 0
      %427 = vmatpush1.bf16.msra.mxu0 0
      %428 = vmatprep.subr.bf16.mxu0 0
      %429 = vmatpush1.bf16.msra.mxu0 0
      %430 = vmatprep.subr.bf16.mxu0 0
      %431 = vmatpush1.bf16.msra.mxu0 0
      %432 = vmatprep.subr.bf16.mxu0 0
      %433 = vmatpush1.bf16.msra.mxu0 0
      %434 = vmatprep.subr.bf16.mxu0 0
      %435 = vmatpush1.bf16.msra.mxu0 0
      %436 = vmatprep.subr.bf16.mxu0 0
      %437 = vmatpush1.bf16.msra.mxu0 0
      %438 = vmatprep.subr.bf16.mxu0 0
      %439 = vmatpush1.bf16.msra.mxu0 0
      %440 = vmatprep.subr.bf16.mxu0 0
      %441 = vmatpush1.bf16.msra.mxu0 0
      %442 = vmatprep.subr.bf16.mxu0 0
      %443 = vmatpush1.bf16.msra.mxu0 0
      %444 = vmatprep.subr.bf16.mxu0 0
      %445 = vmatpush1.bf16.msra.mxu0 0
      %446 = vmatprep.subr.bf16.mxu0 0
      %447 = vmatpush1.bf16.msra.mxu0 0
      %448 = vmatprep.mubr.bf16.mxu0 0
      %449 = vmatmul.mubr.bf16.gmra.mrb[0].mxu0 %v353
      %v450 = vpop.f32.mrb[0].mxu0
      %v451 = vadd.f32 %v403, %v450
      %v452 = vpop.f32.mrb[0].mxu0
      %v453 = vpop.f32.mrb[0].mxu0
      %v454 = vpop.f32.mrb[0].mxu0
      %455 = vdwg.mxu0
      %s456 = scalar_lea.vmem %s4, 128
      %v457 = vld [vmem:[%s456] sm:$0xf]
      %v458 = vld [vmem:[%s456 + $0x4] sm:$0xf]
      %v459 = vld [vmem:[%s456 + $0x8] sm:$0xf]
      %v460 = vld [vmem:[%s456 + $0xc] sm:$0xf]
      %v461 = vlaneseq
      %v462 = vshrl.u32 %v461, 7
      %v463 = vsub.s32 0, %v462
      %v464 = vrot.slane %v331, %v463
      %v469 = vunpack.c.l.b16 %v457
      %v470 = vunpack.c.l.b16 %v458
      %v471 = vunpack.c.l.b16 %v459
      %v472 = vunpack.c.l.b16 %v460
      %v473 = vpack.c.b16 %v470, %v469
      %v474 = vpack.c.b16 %v472, %v471
      %477 = vmatprep.subr.bf16.mxu0 0
      %478 = vmatpush1.bf16.msra.mxu0 %v473
      %479 = vmatprep.subr.bf16.mxu0 0
      %480 = vmatpush1.bf16.msra.mxu0 %v474
      %481 = vmatprep.subr.bf16.mxu0 0
      %482 = vmatpush1.bf16.msra.mxu0 0
      %483 = vmatprep.subr.bf16.mxu0 0
      %484 = vmatpush1.bf16.msra.mxu0 0
      %485 = vmatprep.subr.bf16.mxu0 0
      %486 = vmatpush1.bf16.msra.mxu0 0
      %487 = vmatprep.subr.bf16.mxu0 0
      %488 = vmatpush1.bf16.msra.mxu0 0
      %489 = vmatprep.subr.bf16.mxu0 0
      %490 = vmatpush1.bf16.msra.mxu0 0
      %491 = vmatprep.subr.bf16.mxu0 0
      %492 = vmatpush1.bf16.msra.mxu0 0
      %493 = vmatprep.subr.bf16.mxu0 0
      %494 = vmatpush1.bf16.msra.mxu0 0
      %495 = vmatprep.subr.bf16.mxu0 0
      %496 = vmatpush1.bf16.msra.mxu0 0
      %497 = vmatprep.subr.bf16.mxu0 0
      %498 = vmatpush1.bf16.msra.mxu0 0
      %499 = vmatprep.subr.bf16.mxu0 0
      %500 = vmatpush1.bf16.msra.mxu0 0
      %501 = vmatprep.subr.bf16.mxu0 0
      %502 = vmatpush1.bf16.msra.mxu0 0
      %503 = vmatprep.subr.bf16.mxu0 0
      %504 = vmatpush1.bf16.msra.mxu0 0
      %505 = vmatprep.subr.bf16.mxu0 0
      %506 = vmatpush1.bf16.msra.mxu0 0
      %507 = vmatprep.subr.bf16.mxu0 0
      %508 = vmatpush1.bf16.msra.mxu0 0
      %509 = vmatprep.mubr.bf16.mxu0 0
      %510 = vmatmul.mubr.bf16.gmra.mrb[0].mxu0 %v353
      %v511 = vpop.f32.mrb[0].mxu0
      %v512 = vadd.f32 %v464, %v511
      %v513 = vpop.f32.mrb[0].mxu0
      %v514 = vpop.f32.mrb[0].mxu0
      %v515 = vpop.f32.mrb[0].mxu0
      %516 = vdwg.mxu0
      %vm517 = vcmask 64512
      %v519 = vsel %vm517, %v390, 0
      %v522 = vsel %vm517, %v451, 0
      %524 = vmatprep.subr.mxu0 0.0
      %525 = vmatpush1.xpose.msra.mxu0 %v522
      %526 = vmatprep.subr.mxu0 0.0
      %527 = vmatpush1.xpose.msra.mxu0 0.0
      %528 = vmatprep.subr.mxu0 0.0
      %529 = vmatpush1.xpose.msra.mxu0 0.0
      %530 = vmatprep.subr.mxu0 0.0
      %531 = vmatpush1.xpose.msra.mxu0 0.0
      %532 = vmatprep.subr.mxu0 0.0
      %533 = vmatpush1.xpose.msra.mxu0 0.0
      %534 = vmatprep.subr.mxu0 0.0
      %535 = vmatpush1.xpose.msra.mxu0 0.0
      %536 = vmatprep.subr.mxu0 0.0
      %537 = vmatpush1.xpose.msra.mxu0 0.0
      %538 = vmatprep.subr.mxu0 0.0
      %539 = vmatpush1.xpose.msra.mxu0 0.0
      %540 = vmatprep.subr.mxu0 0.0
      %541 = vmatpush1.xpose.msra.mxu0 0.0
      %542 = vmatprep.subr.mxu0 0.0
      %543 = vmatpush1.xpose.msra.mxu0 0.0
      %544 = vmatprep.subr.mxu0 0.0
      %545 = vmatpush1.xpose.msra.mxu0 0.0
      %546 = vmatprep.subr.mxu0 0.0
      %547 = vmatpush1.xpose.msra.mxu0 0.0
      %548 = vmatprep.subr.mxu0 0.0
      %549 = vmatpush1.xpose.msra.mxu0 0.0
      %550 = vmatprep.subr.mxu0 0.0
      %551 = vmatpush1.xpose.msra.mxu0 0.0
      %552 = vmatprep.subr.mxu0 0.0
      %553 = vmatpush1.xpose.msra.mxu0 0.0
      %554 = vmatprep.subr.mxu0 0.0
      %555 = vmatpush1.xpose.msra.mxu0 0.0
      %556 = vmatprep.subr.mxu0 0.0
      %557 = vmatpush1.xpose.msra.mxu0 0.0
      %558 = vmatprep.subr.mxu0 0.0
      %559 = vmatpush1.xpose.msra.mxu0 0.0
      %560 = vmatprep.subr.mxu0 0.0
      %561 = vmatpush1.xpose.msra.mxu0 0.0
      %562 = vmatprep.subr.mxu0 0.0
      %563 = vmatpush1.xpose.msra.mxu0 0.0
      %564 = vmatprep.subr.mxu0 0.0
      %565 = vmatpush1.xpose.msra.mxu0 0.0
      %566 = vmatprep.subr.mxu0 0.0
      %567 = vmatpush1.xpose.msra.mxu0 0.0
      %568 = vmatprep.subr.mxu0 0.0
      %569 = vmatpush1.xpose.msra.mxu0 0.0
      %570 = vmatprep.subr.mxu0 0.0
      %571 = vmatpush1.xpose.msra.mxu0 0.0
      %572 = vmatprep.subr.mxu0 0.0
      %573 = vmatpush1.xpose.msra.mxu0 0.0
      %574 = vmatprep.subr.mxu0 0.0
      %575 = vmatpush1.xpose.msra.mxu0 0.0
      %576 = vmatprep.subr.mxu0 0.0
      %577 = vmatpush1.xpose.msra.mxu0 0.0
      %578 = vmatprep.subr.mxu0 0.0
      %579 = vmatpush1.xpose.msra.mxu0 0.0
      %580 = vmatprep.subr.mxu0 0.0
      %581 = vmatpush1.xpose.msra.mxu0 0.0
      %582 = vmatprep.subr.mxu0 0.0
      %583 = vmatpush1.xpose.msra.mxu0 0.0
      %584 = vmatprep.subr.mxu0 0.0
      %585 = vmatpush1.xpose.msra.mxu0 0.0
      %586 = vmatprep.subr.mxu0 0.0
      %587 = vmatpush1.xpose.msra.mxu0 0.0
      %588 = vmatprep.mubr.f32.mxu0 0.0
      %589 = vmatmul.mubr.f32.gmra.mrb[0].mxu0 %v519
      %v590 = vpop.f32.mrb[0].mxu0
      %v591 = vadd.f32 0.0, %v590
      %v592 = vpop.f32.mrb[0].mxu0
      %593 = vdwg.mxu0
      %v594 = vsel %vm517, %v591, -inf
      %595 = vmax.xlane.f32.xlu0 %v594
      %v596 = vpop.xlane.xlu0 %595
      %v597 = vsub.f32 %v591, %v596
      %v598 = vmul.f32 %v597, 1.442695
      %v599 = vpow.pop %v598
      %v600 = vsel %vm517, %v599, 0.0
      %601 = vadd.xlane.f32.xlu0 %v600
      %v602 = vpop.xlane.xlu0 %601
      %v603 = vrcp.pop %v602
      %v604 = vmul.f32 %v599, %v603
      %v606 = vsel %vm517, %v604, 0
      %608 = vmatprep.subr.mxu0 0.0
      %609 = vmatpush1.msra.mxu0 %v512
      %610 = vmatprep.subr.mxu0 0.0
      %611 = vmatpush1.msra.mxu0 0.0
      %612 = vmatprep.subr.mxu0 0.0
      %613 = vmatpush1.msra.mxu0 0.0
      %614 = vmatprep.subr.mxu0 0.0
      %615 = vmatpush1.msra.mxu0 0.0
      %616 = vmatprep.subr.mxu0 0.0
      %617 = vmatpush1.msra.mxu0 0.0
      %618 = vmatprep.subr.mxu0 0.0
      %619 = vmatpush1.msra.mxu0 0.0
      %620 = vmatprep.subr.mxu0 0.0
      %621 = vmatpush1.msra.mxu0 0.0
      %622 = vmatprep.subr.mxu0 0.0
      %623 = vmatpush1.msra.mxu0 0.0
      %624 = vmatprep.subr.mxu0 0.0
      %625 = vmatpush1.msra.mxu0 0.0
      %626 = vmatprep.subr.mxu0 0.0
      %627 = vmatpush1.msra.mxu0 0.0
      %628 = vmatprep.subr.mxu0 0.0
      %629 = vmatpush1.msra.mxu0 0.0
      %630 = vmatprep.subr.mxu0 0.0
      %631 = vmatpush1.msra.mxu0 0.0
      %632 = vmatprep.subr.mxu0 0.0
      %633 = vmatpush1.msra.mxu0 0.0
      %634 = vmatprep.subr.mxu0 0.0
      %635 = vmatpush1.msra.mxu0 0.0
      %636 = vmatprep.subr.mxu0 0.0
      %637 = vmatpush1.msra.mxu0 0.0
      %638 = vmatprep.subr.mxu0 0.0
      %639 = vmatpush1.msra.mxu0 0.0
      %640 = vmatprep.subr.mxu0 0.0
      %641 = vmatpush1.msra.mxu0 0.0
      %642 = vmatprep.subr.mxu0 0.0
      %643 = vmatpush1.msra.mxu0 0.0
      %644 = vmatprep.subr.mxu0 0.0
      %645 = vmatpush1.msra.mxu0 0.0
      %646 = vmatprep.subr.mxu0 0.0
      %647 = vmatpush1.msra.mxu0 0.0
      %648 = vmatprep.subr.mxu0 0.0
      %649 = vmatpush1.msra.mxu0 0.0
      %650 = vmatprep.subr.mxu0 0.0
      %651 = vmatpush1.msra.mxu0 0.0
      %652 = vmatprep.subr.mxu0 0.0
      %653 = vmatpush1.msra.mxu0 0.0
      %654 = vmatprep.subr.mxu0 0.0
      %655 = vmatpush1.msra.mxu0 0.0
      %656 = vmatprep.subr.mxu0 0.0
      %657 = vmatpush1.msra.mxu0 0.0
      %658 = vmatprep.subr.mxu0 0.0
      %659 = vmatpush1.msra.mxu0 0.0
      %660 = vmatprep.subr.mxu0 0.0
      %661 = vmatpush1.msra.mxu0 0.0
      %662 = vmatprep.subr.mxu0 0.0
      %663 = vmatpush1.msra.mxu0 0.0
      %664 = vmatprep.subr.mxu0 0.0
      %665 = vmatpush1.msra.mxu0 0.0
      %666 = vmatprep.subr.mxu0 0.0
      %667 = vmatpush1.msra.mxu0 0.0
      %668 = vmatprep.subr.mxu0 0.0
      %669 = vmatpush1.msra.mxu0 0.0
      %670 = vmatprep.subr.mxu0 0.0
      %671 = vmatpush1.msra.mxu0 0.0
      %672 = vmatprep.mubr.f32.mxu0 0.0
      %673 = vmatmul.mubr.f32.gmra.mrb[0].mxu0 %v606
      %v674 = vpop.f32.mrb[0].mxu0
      %v675 = vadd.f32 0.0, %v674
      %v676 = vpop.f32.mrb[0].mxu0
      %677 = vdwg.mxu0
      %v678 = vpack.c.bf16 %v675, %v675
      %v679 = vld [vmem:[%s5] sm:$0xf]
      %s680 = scalar_lea.vmem %s4, 16
      %v681 = vld [vmem:[%s680] sm:$0xf]
      %v682 = vld [vmem:[%s680 + $0x4] sm:$0xf]
      %v683 = vld [vmem:[%s680 + $0x8] sm:$0xf]
      %v684 = vld [vmem:[%s680 + $0xc] sm:$0xf]
      %v685 = vlaneseq
      %v686 = vshrl.u32 %v685, 7
      %v687 = vsub.s32 1, %v686
      %v688 = vrot.slane %v330, %v687
      %v693 = vunpack.c.l.b16 %v681
      %v694 = vunpack.c.l.b16 %v682
      %v695 = vunpack.c.l.b16 %v683
      %v696 = vunpack.c.l.b16 %v684
      %v697 = vpack.c.b16 %v694, %v693
      %v698 = vpack.c.b16 %v696, %v695
      %701 = vmatprep.subr.bf16.mxu0 0
      %702 = vmatpush1.bf16.msra.mxu0 %v697
      %703 = vmatprep.subr.bf16.mxu0 0
      %704 = vmatpush1.bf16.msra.mxu0 %v698
      %705 = vmatprep.subr.bf16.mxu0 0
      %706 = vmatpush1.bf16.msra.mxu0 0
      %707 = vmatprep.subr.bf16.mxu0 0
      %708 = vmatpush1.bf16.msra.mxu0 0
      %709 = vmatprep.subr.bf16.mxu0 0
      %710 = vmatpush1.bf16.msra.mxu0 0
      %711 = vmatprep.subr.bf16.mxu0 0
      %712 = vmatpush1.bf16.msra.mxu0 0
      %713 = vmatprep.subr.bf16.mxu0 0
      %714 = vmatpush1.bf16.msra.mxu0 0
      %715 = vmatprep.subr.bf16.mxu0 0
      %716 = vmatpush1.bf16.msra.mxu0 0
      %717 = vmatprep.subr.bf16.mxu0 0
      %718 = vmatpush1.bf16.msra.mxu0 0
      %719 = vmatprep.subr.bf16.mxu0 0
      %720 = vmatpush1.bf16.msra.mxu0 0
      %721 = vmatprep.subr.bf16.mxu0 0
      %722 = vmatpush1.bf16.msra.mxu0 0
      %723 = vmatprep.subr.bf16.mxu0 0
      %724 = vmatpush1.bf16.msra.mxu0 0
      %725 = vmatprep.subr.bf16.mxu0 0
      %726 = vmatpush1.bf16.msra.mxu0 0
      %727 = vmatprep.subr.bf16.mxu0 0
      %728 = vmatpush1.bf16.msra.mxu0 0
      %729 = vmatprep.subr.bf16.mxu0 0
      %730 = vmatpush1.bf16.msra.mxu0 0
      %731 = vmatprep.subr.bf16.mxu0 0
      %732 = vmatpush1.bf16.msra.mxu0 0
      %733 = vmatprep.mubr.bf16.mxu0 0
      %734 = vmatmul.mubr.bf16.gmra.mrb[0].mxu0 %v353
      %v735 = vpop.f32.mrb[0].mxu0
      %v736 = vadd.f32 %v688, %v735
      %v737 = vpop.f32.mrb[0].mxu0
      %v738 = vpop.f32.mrb[0].mxu0
      %v739 = vpop.f32.mrb[0].mxu0
      %740 = vdwg.mxu0
      %s741 = scalar_lea.vmem %s4, 80
      %v742 = vld [vmem:[%s741] sm:$0xf]
      %v743 = vld [vmem:[%s741 + $0x4] sm:$0xf]
      %v744 = vld [vmem:[%s741 + $0x8] sm:$0xf]
      %v745 = vld [vmem:[%s741 + $0xc] sm:$0xf]
      %v746 = vlaneseq
      %v747 = vshrl.u32 %v746, 7
      %v748 = vsub.s32 5, %v747
      %v749 = vrot.slane %v330, %v748
      %v754 = vunpack.c.l.b16 %v742
      %v755 = vunpack.c.l.b16 %v743
      %v756 = vunpack.c.l.b16 %v744
      %v757 = vunpack.c.l.b16 %v745
      %v758 = vpack.c.b16 %v755, %v754
      %v759 = vpack.c.b16 %v757, %v756
      %762 = vmatprep.subr.bf16.mxu0 0
      %763 = vmatpush1.bf16.msra.mxu0 %v758
      %764 = vmatprep.subr.bf16.mxu0 0
      %765 = vmatpush1.bf16.msra.mxu0 %v759
      %766 = vmatprep.subr.bf16.mxu0 0
      %767 = vmatpush1.bf16.msra.mxu0 0
      %768 = vmatprep.subr.bf16.mxu0 0
      %769 = vmatpush1.bf16.msra.mxu0 0
      %770 = vmatprep.subr.bf16.mxu0 0
      %771 = vmatpush1.bf16.msra.mxu0 0
      %772 = vmatprep.subr.bf16.mxu0 0
      %773 = vmatpush1.bf16.msra.mxu0 0
      %774 = vmatprep.subr.bf16.mxu0 0
      %775 = vmatpush1.bf16.msra.mxu0 0
      %776 = vmatprep.subr.bf16.mxu0 0
      %777 = vmatpush1.bf16.msra.mxu0 0
      %778 = vmatprep.subr.bf16.mxu0 0
      %779 = vmatpush1.bf16.msra.mxu0 0
      %780 = vmatprep.subr.bf16.mxu0 0
      %781 = vmatpush1.bf16.msra.mxu0 0
      %782 = vmatprep.subr.bf16.mxu0 0
      %783 = vmatpush1.bf16.msra.mxu0 0
      %784 = vmatprep.subr.bf16.mxu0 0
      %785 = vmatpush1.bf16.msra.mxu0 0
      %786 = vmatprep.subr.bf16.mxu0 0
      %787 = vmatpush1.bf16.msra.mxu0 0
      %788 = vmatprep.subr.bf16.mxu0 0
      %789 = vmatpush1.bf16.msra.mxu0 0
      %790 = vmatprep.subr.bf16.mxu0 0
      %791 = vmatpush1.bf16.msra.mxu0 0
      %792 = vmatprep.subr.bf16.mxu0 0
      %793 = vmatpush1.bf16.msra.mxu0 0
      %794 = vmatprep.mubr.bf16.mxu0 0
      %795 = vmatmul.mubr.bf16.gmra.mrb[0].mxu0 %v353
      %v796 = vpop.f32.mrb[0].mxu0
      %v797 = vadd.f32 %v749, %v796
      %v798 = vpop.f32.mrb[0].mxu0
      %v799 = vpop.f32.mrb[0].mxu0
      %v800 = vpop.f32.mrb[0].mxu0
      %801 = vdwg.mxu0
      %s802 = scalar_lea.vmem %s4, 144
      %v803 = vld [vmem:[%s802] sm:$0xf]
      %v804 = vld [vmem:[%s802 + $0x4] sm:$0xf]
      %v805 = vld [vmem:[%s802 + $0x8] sm:$0xf]
      %v806 = vld [vmem:[%s802 + $0xc] sm:$0xf]
      %v807 = vlaneseq
      %v808 = vshrl.u32 %v807, 7
      %v809 = vsub.s32 1, %v808
      %v810 = vrot.slane %v331, %v809
      %v815 = vunpack.c.l.b16 %v803
      %v816 = vunpack.c.l.b16 %v804
      %v817 = vunpack.c.l.b16 %v805
      %v818 = vunpack.c.l.b16 %v806
      %v819 = vpack.c.b16 %v816, %v815
      %v820 = vpack.c.b16 %v818, %v817
      %823 = vmatprep.subr.bf16.mxu0 0
      %824 = vmatpush1.bf16.msra.mxu0 %v819
      %825 = vmatprep.subr.bf16.mxu0 0
      %826 = vmatpush1.bf16.msra.mxu0 %v820
      %827 = vmatprep.subr.bf16.mxu0 0
      %828 = vmatpush1.bf16.msra.mxu0 0
      %829 = vmatprep.subr.bf16.mxu0 0
      %830 = vmatpush1.bf16.msra.mxu0 0
      %831 = vmatprep.subr.bf16.mxu0 0
      %832 = vmatpush1.bf16.msra.mxu0 0
      %833 = vmatprep.subr.bf16.mxu0 0
      %834 = vmatpush1.bf16.msra.mxu0 0
      %835 = vmatprep.subr.bf16.mxu0 0
      %836 = vmatpush1.bf16.msra.mxu0 0
      %837 = vmatprep.subr.bf16.mxu0 0
      %838 = vmatpush1.bf16.msra.mxu0 0
      %839 = vmatprep.subr.bf16.mxu0 0
      %840 = vmatpush1.bf16.msra.mxu0 0
      %841 = vmatprep.subr.bf16.mxu0 0
      %842 = vmatpush1.bf16.msra.mxu0 0
      %843 = vmatprep.subr.bf16.mxu0 0
      %844 = vmatpush1.bf16.msra.mxu0 0
      %845 = vmatprep.subr.bf16.mxu0 0
      %846 = vmatpush1.bf16.msra.mxu0 0
      %847 = vmatprep.subr.bf16.mxu0 0
      %848 = vmatpush1.bf16.msra.mxu0 0
      %849 = vmatprep.subr.bf16.mxu0 0
      %850 = vmatpush1.bf16.msra.mxu0 0
      %851 = vmatprep.subr.bf16.mxu0 0
      %852 = vmatpush1.bf16.msra.mxu0 0
      %853 = vmatprep.subr.bf16.mxu0 0
      %854 = vmatpush1.bf16.msra.mxu0 0
      %855 = vmatprep.mubr.bf16.mxu0 0
      %856 = vmatmul.mubr.bf16.gmra.mrb[0].mxu0 %v353
      %v857 = vpop.f32.mrb[0].mxu0
      %v858 = vadd.f32 %v810, %v857
      %v859 = vpop.f32.mrb[0].mxu0
      %v860 = vpop.f32.mrb[0].mxu0
      %v861 = vpop.f32.mrb[0].mxu0
      %862 = vdwg.mxu0
      %v864 = vsel %vm517, %v736, 0
      %v867 = vsel %vm517, %v797, 0
      %869 = vmatprep.subr.mxu0 0.0
      %870 = vmatpush1.xpose.msra.mxu0 %v867
      %871 = vmatprep.subr.mxu0 0.0
      %872 = vmatpush1.xpose.msra.mxu0 0.0
      %873 = vmatprep.subr.mxu0 0.0
      %874 = vmatpush1.xpose.msra.mxu0 0.0
      %875 = vmatprep.subr.mxu0 0.0
      %876 = vmatpush1.xpose.msra.mxu0 0.0
      %877 = vmatprep.subr.mxu0 0.0
      %878 = vmatpush1.xpose.msra.mxu0 0.0
      %879 = vmatprep.subr.mxu0 0.0
      %880 = vmatpush1.xpose.msra.mxu0 0.0
      %881 = vmatprep.subr.mxu0 0.0
      %882 = vmatpush1.xpose.msra.mxu0 0.0
      %883 = vmatprep.subr.mxu0 0.0
      %884 = vmatpush1.xpose.msra.mxu0 0.0
      %885 = vmatprep.subr.mxu0 0.0
      %886 = vmatpush1.xpose.msra.mxu0 0.0
      %887 = vmatprep.subr.mxu0 0.0
      %888 = vmatpush1.xpose.msra.mxu0 0.0
      %889 = vmatprep.subr.mxu0 0.0
      %890 = vmatpush1.xpose.msra.mxu0 0.0
      %891 = vmatprep.subr.mxu0 0.0
      %892 = vmatpush1.xpose.msra.mxu0 0.0
      %893 = vmatprep.subr.mxu0 0.0
      %894 = vmatpush1.xpose.msra.mxu0 0.0
      %895 = vmatprep.subr.mxu0 0.0
      %896 = vmatpush1.xpose.msra.mxu0 0.0
      %897 = vmatprep.subr.mxu0 0.0
      %898 = vmatpush1.xpose.msra.mxu0 0.0
      %899 = vmatprep.subr.mxu0 0.0
      %900 = vmatpush1.xpose.msra.mxu0 0.0
      %901 = vmatprep.subr.mxu0 0.0
      %902 = vmatpush1.xpose.msra.mxu0 0.0
      %903 = vmatprep.subr.mxu0 0.0
      %904 = vmatpush1.xpose.msra.mxu0 0.0
      %905 = vmatprep.subr.mxu0 0.0
      %906 = vmatpush1.xpose.msra.mxu0 0.0
      %907 = vmatprep.subr.mxu0 0.0
      %908 = vmatpush1.xpose.msra.mxu0 0.0
      %909 = vmatprep.subr.mxu0 0.0
      %910 = vmatpush1.xpose.msra.mxu0 0.0
      %911 = vmatprep.subr.mxu0 0.0
      %912 = vmatpush1.xpose.msra.mxu0 0.0
      %913 = vmatprep.subr.mxu0 0.0
      %914 = vmatpush1.xpose.msra.mxu0 0.0
      %915 = vmatprep.subr.mxu0 0.0
      %916 = vmatpush1.xpose.msra.mxu0 0.0
      %917 = vmatprep.subr.mxu0 0.0
      %918 = vmatpush1.xpose.msra.mxu0 0.0
      %919 = vmatprep.subr.mxu0 0.0
      %920 = vmatpush1.xpose.msra.mxu0 0.0
      %921 = vmatprep.subr.mxu0 0.0
      %922 = vmatpush1.xpose.msra.mxu0 0.0
      %923 = vmatprep.subr.mxu0 0.0
      %924 = vmatpush1.xpose.msra.mxu0 0.0
      %925 = vmatprep.subr.mxu0 0.0
      %926 = vmatpush1.xpose.msra.mxu0 0.0
      %927 = vmatprep.subr.mxu0 0.0
      %928 = vmatpush1.xpose.msra.mxu0 0.0
      %929 = vmatprep.subr.mxu0 0.0
      %930 = vmatpush1.xpose.msra.mxu0 0.0
      %931 = vmatprep.subr.mxu0 0.0
      %932 = vmatpush1.xpose.msra.mxu0 0.0
      %933 = vmatprep.mubr.f32.mxu0 0.0
      %934 = vmatmul.mubr.f32.gmra.mrb[0].mxu0 %v864
      %v935 = vpop.f32.mrb[0].mxu0
      %v936 = vadd.f32 0.0, %v935
      %v937 = vpop.f32.mrb[0].mxu0
      %938 = vdwg.mxu0
      %v939 = vsel %vm517, %v936, -inf
      %940 = vmax.xlane.f32.xlu0 %v939
      %v941 = vpop.xlane.xlu0 %940
      %v942 = vsub.f32 %v936, %v941
      %v943 = vmul.f32 %v942, 1.442695
      %v944 = vpow.pop %v943
      %v945 = vsel %vm517, %v944, 0.0
      %946 = vadd.xlane.f32.xlu0 %v945
      %v947 = vpop.xlane.xlu0 %946
      %v948 = vrcp.pop %v947
      %v949 = vmul.f32 %v944, %v948
      %v951 = vsel %vm517, %v949, 0
      %953 = vmatprep.subr.mxu0 0.0
      %954 = vmatpush1.msra.mxu0 %v858
      %955 = vmatprep.subr.mxu0 0.0
      %956 = vmatpush1.msra.mxu0 0.0
      %957 = vmatprep.subr.mxu0 0.0
      %958 = vmatpush1.msra.mxu0 0.0
      %959 = vmatprep.subr.mxu0 0.0
      %960 = vmatpush1.msra.mxu0 0.0
      %961 = vmatprep.subr.mxu0 0.0
      %962 = vmatpush1.msra.mxu0 0.0
      %963 = vmatprep.subr.mxu0 0.0
      %964 = vmatpush1.msra.mxu0 0.0
      %965 = vmatprep.subr.mxu0 0.0
      %966 = vmatpush1.msra.mxu0 0.0
      %967 = vmatprep.subr.mxu0 0.0
      %968 = vmatpush1.msra.mxu0 0.0
      %969 = vmatprep.subr.mxu0 0.0
      %970 = vmatpush1.msra.mxu0 0.0
      %971 = vmatprep.subr.mxu0 0.0
      %972 = vmatpush1.msra.mxu0 0.0
      %973 = vmatprep.subr.mxu0 0.0
      %974 = vmatpush1.msra.mxu0 0.0
      %975 = vmatprep.subr.mxu0 0.0
      %976 = vmatpush1.msra.mxu0 0.0
      %977 = vmatprep.subr.mxu0 0.0
      %978 = vmatpush1.msra.mxu0 0.0
      %979 = vmatprep.subr.mxu0 0.0
      %980 = vmatpush1.msra.mxu0 0.0
      %981 = vmatprep.subr.mxu0 0.0
      %982 = vmatpush1.msra.mxu0 0.0
      %983 = vmatprep.subr.mxu0 0.0
      %984 = vmatpush1.msra.mxu0 0.0
      %985 = vmatprep.subr.mxu0 0.0
      %986 = vmatpush1.msra.mxu0 0.0
      %987 = vmatprep.subr.mxu0 0.0
      %988 = vmatpush1.msra.mxu0 0.0
      %989 = vmatprep.subr.mxu0 0.0
      %990 = vmatpush1.msra.mxu0 0.0
      %991 = vmatprep.subr.mxu0 0.0
      %992 = vmatpush1.msra.mxu0 0.0
      %993 = vmatprep.subr.mxu0 0.0
      %994 = vmatpush1.msra.mxu0 0.0
      %995 = vmatprep.subr.mxu0 0.0
      %996 = vmatpush1.msra.mxu0 0.0
      %997 = vmatprep.subr.mxu0 0.0
      %998 = vmatpush1.msra.mxu0 0.0
      %999 = vmatprep.subr.mxu0 0.0
      %1000 = vmatpush1.msra.mxu0 0.0
      %1001 = vmatprep.subr.mxu0 0.0
      %1002 = vmatpush1.msra.mxu0 0.0
      %1003 = vmatprep.subr.mxu0 0.0
      %1004 = vmatpush1.msra.mxu0 0.0
      %1005 = vmatprep.subr.mxu0 0.0
      %1006 = vmatpush1.msra.mxu0 0.0
      %1007 = vmatprep.subr.mxu0 0.0
      %1008 = vmatpush1.msra.mxu0 0.0
      %1009 = vmatprep.subr.mxu0 0.0
      %1010 = vmatpush1.msra.mxu0 0.0
      %1011 = vmatprep.subr.mxu0 0.0
      %1012 = vmatpush1.msra.mxu0 0.0
      %1013 = vmatprep.subr.mxu0 0.0
      %1014 = vmatpush1.msra.mxu0 0.0
      %1015 = vmatprep.subr.mxu0 0.0
      %1016 = vmatpush1.msra.mxu0 0.0
      %1017 = vmatprep.mubr.f32.mxu0 0.0
      %1018 = vmatmul.mubr.f32.gmra.mrb[0].mxu0 %v951
      %v1019 = vpop.f32.mrb[0].mxu0
      %v1020 = vadd.f32 0.0, %v1019
      %v1021 = vpop.f32.mrb[0].mxu0
      %1022 = vdwg.mxu0
      %v1023 = vpack.c.bf16 %v1020, %v1020
      %s1024 = scalar_lea.vmem %s5, 4
      %v1025 = vld [vmem:[%s1024] sm:$0xf]
      %v1027 = vsel %vm517, %v1023, 0
      %vm1029 = vcmask 1043456
      %v1031 = vsel %vm1029, %v1025, 0
      %1033 = vmatprep.subr.bf16.mxu0 0
      %1034 = vmatpush1.bf16.msra.mxu0 %v1031
      %1035 = vmatprep.subr.bf16.mxu0 0
      %1036 = vmatpush1.bf16.msra.mxu0 0
      %1037 = vmatprep.subr.bf16.mxu0 0
      %1038 = vmatpush1.bf16.msra.mxu0 0
      %1039 = vmatprep.subr.bf16.mxu0 0
      %1040 = vmatpush1.bf16.msra.mxu0 0
      %1041 = vmatprep.subr.bf16.mxu0 0
      %1042 = vmatpush1.bf16.msra.mxu0 0
      %1043 = vmatprep.subr.bf16.mxu0 0
      %1044 = vmatpush1.bf16.msra.mxu0 0
      %1045 = vmatprep.subr.bf16.mxu0 0
      %1046 = vmatpush1.bf16.msra.mxu0 0
      %1047 = vmatprep.subr.bf16.mxu0 0
      %1048 = vmatpush1.bf16.msra.mxu0 0
      %1049 = vmatprep.subr.bf16.mxu0 0
      %1050 = vmatpush1.bf16.msra.mxu0 0
      %1051 = vmatprep.subr.bf16.mxu0 0
      %1052 = vmatpush1.bf16.msra.mxu0 0
      %1053 = vmatprep.subr.bf16.mxu0 0
      %1054 = vmatpush1.bf16.msra.mxu0 0
      %1055 = vmatprep.subr.bf16.mxu0 0
      %1056 = vmatpush1.bf16.msra.mxu0 0
      %1057 = vmatprep.subr.bf16.mxu0 0
      %1058 = vmatpush1.bf16.msra.mxu0 0
      %1059 = vmatprep.subr.bf16.mxu0 0
      %1060 = vmatpush1.bf16.msra.mxu0 0
      %1061 = vmatprep.subr.bf16.mxu0 0
      %1062 = vmatpush1.bf16.msra.mxu0 0
      %1063 = vmatprep.subr.bf16.mxu0 0
      %1064 = vmatpush1.bf16.msra.mxu0 0
      %1065 = vmatprep.mubr.bf16.mxu0 0
      %1066 = vmatmul.mubr.bf16.gmra.mrb[0].mxu0 %v1027
      %v1067 = vpop.f32.mrb[0].mxu0
      %v1068 = vadd.f32 0.0, %v1067
      %v1069 = vpop.f32.mrb[0].mxu0
      %v1070 = vpop.f32.mrb[0].mxu0
      %v1071 = vpop.f32.mrb[0].mxu0
      %1072 = vdwg.mxu0
      %v1074 = vsel %vm517, %v678, 0
      %v1077 = vsel %vm1029, %v679, 0
      %1079 = vmatprep.subr.bf16.mxu0 0
      %1080 = vmatpush1.bf16.msra.mxu0 %v1077
      %1081 = vmatprep.subr.bf16.mxu0 0
      %1082 = vmatpush1.bf16.msra.mxu0 0
      %1083 = vmatprep.subr.bf16.mxu0 0
      %1084 = vmatpush1.bf16.msra.mxu0 0
      %1085 = vmatprep.subr.bf16.mxu0 0
      %1086 = vmatpush1.bf16.msra.mxu0 0
      %1087 = vmatprep.subr.bf16.mxu0 0
      %1088 = vmatpush1.bf16.msra.mxu0 0
      %1089 = vmatprep.subr.bf16.mxu0 0
      %1090 = vmatpush1.bf16.msra.mxu0 0
      %1091 = vmatprep.subr.bf16.mxu0 0
      %1092 = vmatpush1.bf16.msra.mxu0 0
      %1093 = vmatprep.subr.bf16.mxu0 0
      %1094 = vmatpush1.bf16.msra.mxu0 0
      %1095 = vmatprep.subr.bf16.mxu0 0
      %1096 = vmatpush1.bf16.msra.mxu0 0
      %1097 = vmatprep.subr.bf16.mxu0 0
      %1098 = vmatpush1.bf16.msra.mxu0 0
      %1099 = vmatprep.subr.bf16.mxu0 0
      %1100 = vmatpush1.bf16.msra.mxu0 0
      %1101 = vmatprep.subr.bf16.mxu0 0
      %1102 = vmatpush1.bf16.msra.mxu0 0
      %1103 = vmatprep.subr.bf16.mxu0 0
      %1104 = vmatpush1.bf16.msra.mxu0 0
      %1105 = vmatprep.subr.bf16.mxu0 0
      %1106 = vmatpush1.bf16.msra.mxu0 0
      %1107 = vmatprep.subr.bf16.mxu0 0
      %1108 = vmatpush1.bf16.msra.mxu0 0
      %1109 = vmatprep.subr.bf16.mxu0 0
      %1110 = vmatpush1.bf16.msra.mxu0 0
      %1111 = vmatprep.mubr.bf16.mxu0 0
      %1112 = vmatmul.mubr.bf16.gmra.mrb[0].mxu0 %v1074
      %v1113 = vpop.f32.mrb[0].mxu0
      %v1114 = vadd.f32 %v1068, %v1113
      %v1115 = vpop.f32.mrb[0].mxu0
      %v1116 = vpop.f32.mrb[0].mxu0
      %v1117 = vpop.f32.mrb[0].mxu0
      %1118 = vdwg.mxu0
      %s1119 = scalar_lea.vmem %s4, 32
      %v1120 = vld [vmem:[%s1119] sm:$0xf]
      %v1121 = vld [vmem:[%s1119 + $0x4] sm:$0xf]
      %v1122 = vld [vmem:[%s1119 + $0x8] sm:$0xf]
      %v1123 = vld [vmem:[%s1119 + $0xc] sm:$0xf]
      %v1124 = vlaneseq
      %v1125 = vshrl.u32 %v1124, 7
      %v1126 = vsub.s32 2, %v1125
      %v1127 = vrot.slane %v330, %v1126
      %v1132 = vunpack.c.l.b16 %v1120
      %v1133 = vunpack.c.l.b16 %v1121
      %v1134 = vunpack.c.l.b16 %v1122
      %v1135 = vunpack.c.l.b16 %v1123
      %v1136 = vpack.c.b16 %v1133, %v1132
      %v1137 = vpack.c.b16 %v1135, %v1134
      %1140 = vmatprep.subr.bf16.mxu0 0
      %1141 = vmatpush1.bf16.msra.mxu0 %v1136
      %1142 = vmatprep.subr.bf16.mxu0 0
      %1143 = vmatpush1.bf16.msra.mxu0 %v1137
      %1144 = vmatprep.subr.bf16.mxu0 0
      %1145 = vmatpush1.bf16.msra.mxu0 0
      %1146 = vmatprep.subr.bf16.mxu0 0
      %1147 = vmatpush1.bf16.msra.mxu0 0
      %1148 = vmatprep.subr.bf16.mxu0 0
      %1149 = vmatpush1.bf16.msra.mxu0 0
      %1150 = vmatprep.subr.bf16.mxu0 0
      %1151 = vmatpush1.bf16.msra.mxu0 0
      %1152 = vmatprep.subr.bf16.mxu0 0
      %1153 = vmatpush1.bf16.msra.mxu0 0
      %1154 = vmatprep.subr.bf16.mxu0 0
      %1155 = vmatpush1.bf16.msra.mxu0 0
      %1156 = vmatprep.subr.bf16.mxu0 0
      %1157 = vmatpush1.bf16.msra.mxu0 0
      %1158 = vmatprep.subr.bf16.mxu0 0
      %1159 = vmatpush1.bf16.msra.mxu0 0
      %1160 = vmatprep.subr.bf16.mxu0 0
      %1161 = vmatpush1.bf16.msra.mxu0 0
      %1162 = vmatprep.subr.bf16.mxu0 0
      %1163 = vmatpush1.bf16.msra.mxu0 0
      %1164 = vmatprep.subr.bf16.mxu0 0
      %1165 = vmatpush1.bf16.msra.mxu0 0
      %1166 = vmatprep.subr.bf16.mxu0 0
      %1167 = vmatpush1.bf16.msra.mxu0 0
      %1168 = vmatprep.subr.bf16.mxu0 0
      %1169 = vmatpush1.bf16.msra.mxu0 0
      %1170 = vmatprep.subr.bf16.mxu0 0
      %1171 = vmatpush1.bf16.msra.mxu0 0
      %1172 = vmatprep.mubr.bf16.mxu0 0
      %1173 = vmatmul.mubr.bf16.gmra.mrb[0].mxu0 %v353
      %v1174 = vpop.f32.mrb[0].mxu0
      %v1175 = vadd.f32 %v1127, %v1174
      %v1176 = vpop.f32.mrb[0].mxu0
      %v1177 = vpop.f32.mrb[0].mxu0
      %v1178 = vpop.f32.mrb[0].mxu0
      %1179 = vdwg.mxu0
      %s1180 = scalar_lea.vmem %s4, 96
      %v1181 = vld [vmem:[%s1180] sm:$0xf]
      %v1182 = vld [vmem:[%s1180 + $0x4] sm:$0xf]
      %v1183 = vld [vmem:[%s1180 + $0x8] sm:$0xf]
      %v1184 = vld [vmem:[%s1180 + $0xc] sm:$0xf]
      %v1185 = vlaneseq
      %v1186 = vshrl.u32 %v1185, 7
      %v1187 = vsub.s32 6, %v1186
      %v1188 = vrot.slane %v330, %v1187
      %v1193 = vunpack.c.l.b16 %v1181
      %v1194 = vunpack.c.l.b16 %v1182
      %v1195 = vunpack.c.l.b16 %v1183
      %v1196 = vunpack.c.l.b16 %v1184
      %v1197 = vpack.c.b16 %v1194, %v1193
      %v1198 = vpack.c.b16 %v1196, %v1195
      %1201 = vmatprep.subr.bf16.mxu0 0
      %1202 = vmatpush1.bf16.msra.mxu0 %v1197
      %1203 = vmatprep.subr.bf16.mxu0 0
      %1204 = vmatpush1.bf16.msra.mxu0 %v1198
      %1205 = vmatprep.subr.bf16.mxu0 0
      %1206 = vmatpush1.bf16.msra.mxu0 0
      %1207 = vmatprep.subr.bf16.mxu0 0
      %1208 = vmatpush1.bf16.msra.mxu0 0
      %1209 = vmatprep.subr.bf16.mxu0 0
      %1210 = vmatpush1.bf16.msra.mxu0 0
      %1211 = vmatprep.subr.bf16.mxu0 0
      %1212 = vmatpush1.bf16.msra.mxu0 0
      %1213 = vmatprep.subr.bf16.mxu0 0
      %1214 = vmatpush1.bf16.msra.mxu0 0
      %1215 = vmatprep.subr.bf16.mxu0 0
      %1216 = vmatpush1.bf16.msra.mxu0 0
      %1217 = vmatprep.subr.bf16.mxu0 0
      %1218 = vmatpush1.bf16.msra.mxu0 0
      %1219 = vmatprep.subr.bf16.mxu0 0
      %1220 = vmatpush1.bf16.msra.mxu0 0
      %1221 = vmatprep.subr.bf16.mxu0 0
      %1222 = vmatpush1.bf16.msra.mxu0 0
      %1223 = vmatprep.subr.bf16.mxu0 0
      %1224 = vmatpush1.bf16.msra.mxu0 0
      %1225 = vmatprep.subr.bf16.mxu0 0
      %1226 = vmatpush1.bf16.msra.mxu0 0
      %1227 = vmatprep.subr.bf16.mxu0 0
      %1228 = vmatpush1.bf16.msra.mxu0 0
      %1229 = vmatprep.subr.bf16.mxu0 0
      %1230 = vmatpush1.bf16.msra.mxu0 0
      %1231 = vmatprep.subr.bf16.mxu0 0
      %1232 = vmatpush1.bf16.msra.mxu0 0
      %1233 = vmatprep.mubr.bf16.mxu0 0
      %1234 = vmatmul.mubr.bf16.gmra.mrb[0].mxu0 %v353
      %v1235 = vpop.f32.mrb[0].mxu0
      %v1236 = vadd.f32 %v1188, %v1235
      %v1237 = vpop.f32.mrb[0].mxu0
      %v1238 = vpop.f32.mrb[0].mxu0
      %v1239 = vpop.f32.mrb[0].mxu0
      %1240 = vdwg.mxu0
      %s1241 = scalar_lea.vmem %s4, 160
      %v1242 = vld [vmem:[%s1241] sm:$0xf]
      %v1243 = vld [vmem:[%s1241 + $0x4] sm:$0xf]
      %v1244 = vld [vmem:[%s1241 + $0x8] sm:$0xf]
      %v1245 = vld [vmem:[%s1241 + $0xc] sm:$0xf]
      %v1246 = vlaneseq
      %v1247 = vshrl.u32 %v1246, 7
      %v1248 = vsub.s32 2, %v1247
      %v1249 = vrot.slane %v331, %v1248
      %v1254 = vunpack.c.l.b16 %v1242
      %v1255 = vunpack.c.l.b16 %v1243
      %v1256 = vunpack.c.l.b16 %v1244
      %v1257 = vunpack.c.l.b16 %v1245
      %v1258 = vpack.c.b16 %v1255, %v1254
      %v1259 = vpack.c.b16 %v1257, %v1256
      %1262 = vmatprep.subr.bf16.mxu0 0
      %1263 = vmatpush1.bf16.msra.mxu0 %v1258
      %1264 = vmatprep.subr.bf16.mxu0 0
      %1265 = vmatpush1.bf16.msra.mxu0 %v1259
      %1266 = vmatprep.subr.bf16.mxu0 0
      %1267 = vmatpush1.bf16.msra.mxu0 0
      %1268 = vmatprep.subr.bf16.mxu0 0
      %1269 = vmatpush1.bf16.msra.mxu0 0
      %1270 = vmatprep.subr.bf16.mxu0 0
      %1271 = vmatpush1.bf16.msra.mxu0 0
      %1272 = vmatprep.subr.bf16.mxu0 0
      %1273 = vmatpush1.bf16.msra.mxu0 0
      %1274 = vmatprep.subr.bf16.mxu0 0
      %1275 = vmatpush1.bf16.msra.mxu0 0
      %1276 = vmatprep.subr.bf16.mxu0 0
      %1277 = vmatpush1.bf16.msra.mxu0 0
      %1278 = vmatprep.subr.bf16.mxu0 0
      %1279 = vmatpush1.bf16.msra.mxu0 0
      %1280 = vmatprep.subr.bf16.mxu0 0
      %1281 = vmatpush1.bf16.msra.mxu0 0
      %1282 = vmatprep.subr.bf16.mxu0 0
      %1283 = vmatpush1.bf16.msra.mxu0 0
      %1284 = vmatprep.subr.bf16.mxu0 0
      %1285 = vmatpush1.bf16.msra.mxu0 0
      %1286 = vmatprep.subr.bf16.mxu0 0
      %1287 = vmatpush1.bf16.msra.mxu0 0
      %1288 = vmatprep.subr.bf16.mxu0 0
      %1289 = vmatpush1.bf16.msra.mxu0 0
      %1290 = vmatprep.subr.bf16.mxu0 0
      %1291 = vmatpush1.bf16.msra.mxu0 0
      %1292 = vmatprep.subr.bf16.mxu0 0
      %1293 = vmatpush1.bf16.msra.mxu0 0
      %1294 = vmatprep.mubr.bf16.mxu0 0
      %1295 = vmatmul.mubr.bf16.gmra.mrb[0].mxu0 %v353
      %v1296 = vpop.f32.mrb[0].mxu0
      %v1297 = vadd.f32 %v1249, %v1296
      %v1298 = vpop.f32.mrb[0].mxu0
      %v1299 = vpop.f32.mrb[0].mxu0
      %v1300 = vpop.f32.mrb[0].mxu0
      %1301 = vdwg.mxu0
      %v1303 = vsel %vm517, %v1175, 0
      %v1306 = vsel %vm517, %v1236, 0
      %1308 = vmatprep.subr.mxu0 0.0
      %1309 = vmatpush1.xpose.msra.mxu0 %v1306
      %1310 = vmatprep.subr.mxu0 0.0
      %1311 = vmatpush1.xpose.msra.mxu0 0.0
      %1312 = vmatprep.subr.mxu0 0.0
      %1313 = vmatpush1.xpose.msra.mxu0 0.0
      %1314 = vmatprep.subr.mxu0 0.0
      %1315 = vmatpush1.xpose.msra.mxu0 0.0
      %1316 = vmatprep.subr.mxu0 0.0
      %1317 = vmatpush1.xpose.msra.mxu0 0.0
      %1318 = vmatprep.subr.mxu0 0.0
      %1319 = vmatpush1.xpose.msra.mxu0 0.0
      %1320 = vmatprep.subr.mxu0 0.0
      %1321 = vmatpush1.xpose.msra.mxu0 0.0
      %1322 = vmatprep.subr.mxu0 0.0
      %1323 = vmatpush1.xpose.msra.mxu0 0.0
      %1324 = vmatprep.subr.mxu0 0.0
      %1325 = vmatpush1.xpose.msra.mxu0 0.0
      %1326 = vmatprep.subr.mxu0 0.0
      %1327 = vmatpush1.xpose.msra.mxu0 0.0
      %1328 = vmatprep.subr.mxu0 0.0
      %1329 = vmatpush1.xpose.msra.mxu0 0.0
      %1330 = vmatprep.subr.mxu0 0.0
      %1331 = vmatpush1.xpose.msra.mxu0 0.0
      %1332 = vmatprep.subr.mxu0 0.0
      %1333 = vmatpush1.xpose.msra.mxu0 0.0
      %1334 = vmatprep.subr.mxu0 0.0
      %1335 = vmatpush1.xpose.msra.mxu0 0.0
      %1336 = vmatprep.subr.mxu0 0.0
      %1337 = vmatpush1.xpose.msra.mxu0 0.0
      %1338 = vmatprep.subr.mxu0 0.0
      %1339 = vmatpush1.xpose.msra.mxu0 0.0
      %1340 = vmatprep.subr.mxu0 0.0
      %1341 = vmatpush1.xpose.msra.mxu0 0.0
      %1342 = vmatprep.subr.mxu0 0.0
      %1343 = vmatpush1.xpose.msra.mxu0 0.0
      %1344 = vmatprep.subr.mxu0 0.0
      %1345 = vmatpush1.xpose.msra.mxu0 0.0
      %1346 = vmatprep.subr.mxu0 0.0
      %1347 = vmatpush1.xpose.msra.mxu0 0.0
      %1348 = vmatprep.subr.mxu0 0.0
      %1349 = vmatpush1.xpose.msra.mxu0 0.0
      %1350 = vmatprep.subr.mxu0 0.0
      %1351 = vmatpush1.xpose.msra.mxu0 0.0
      %1352 = vmatprep.subr.mxu0 0.0
      %1353 = vmatpush1.xpose.msra.mxu0 0.0
      %1354 = vmatprep.subr.mxu0 0.0
      %1355 = vmatpush1.xpose.msra.mxu0 0.0
      %1356 = vmatprep.subr.mxu0 0.0
      %1357 = vmatpush1.xpose.msra.mxu0 0.0
      %1358 = vmatprep.subr.mxu0 0.0
      %1359 = vmatpush1.xpose.msra.mxu0 0.0
      %1360 = vmatprep.subr.mxu0 0.0
      %1361 = vmatpush1.xpose.msra.mxu0 0.0
      %1362 = vmatprep.subr.mxu0 0.0
      %1363 = vmatpush1.xpose.msra.mxu0 0.0
      %1364 = vmatprep.subr.mxu0 0.0
      %1365 = vmatpush1.xpose.msra.mxu0 0.0
      %1366 = vmatprep.subr.mxu0 0.0
      %1367 = vmatpush1.xpose.msra.mxu0 0.0
      %1368 = vmatprep.subr.mxu0 0.0
      %1369 = vmatpush1.xpose.msra.mxu0 0.0
      %1370 = vmatprep.subr.mxu0 0.0
      %1371 = vmatpush1.xpose.msra.mxu0 0.0
      %1372 = vmatprep.mubr.f32.mxu0 0.0
      %1373 = vmatmul.mubr.f32.gmra.mrb[0].mxu0 %v1303
      %v1374 = vpop.f32.mrb[0].mxu0
      %v1375 = vadd.f32 0.0, %v1374
      %v1376 = vpop.f32.mrb[0].mxu0
      %1377 = vdwg.mxu0
      %v1378 = vsel %vm517, %v1375, -inf
      %1379 = vmax.xlane.f32.xlu0 %v1378
      %v1380 = vpop.xlane.xlu0 %1379
      %v1381 = vsub.f32 %v1375, %v1380
      %v1382 = vmul.f32 %v1381, 1.442695
      %v1383 = vpow.pop %v1382
      %v1384 = vsel %vm517, %v1383, 0.0
      %1385 = vadd.xlane.f32.xlu0 %v1384
      %v1386 = vpop.xlane.xlu0 %1385
      %v1387 = vrcp.pop %v1386
      %v1388 = vmul.f32 %v1383, %v1387
      %v1390 = vsel %vm517, %v1388, 0
      %1392 = vmatprep.subr.mxu0 0.0
      %1393 = vmatpush1.msra.mxu0 %v1297
      %1394 = vmatprep.subr.mxu0 0.0
      %1395 = vmatpush1.msra.mxu0 0.0
      %1396 = vmatprep.subr.mxu0 0.0
      %1397 = vmatpush1.msra.mxu0 0.0
      %1398 = vmatprep.subr.mxu0 0.0
      %1399 = vmatpush1.msra.mxu0 0.0
      %1400 = vmatprep.subr.mxu0 0.0
      %1401 = vmatpush1.msra.mxu0 0.0
      %1402 = vmatprep.subr.mxu0 0.0
      %1403 = vmatpush1.msra.mxu0 0.0
      %1404 = vmatprep.subr.mxu0 0.0
      %1405 = vmatpush1.msra.mxu0 0.0
      %1406 = vmatprep.subr.mxu0 0.0
      %1407 = vmatpush1.msra.mxu0 0.0
      %1408 = vmatprep.subr.mxu0 0.0
      %1409 = vmatpush1.msra.mxu0 0.0
      %1410 = vmatprep.subr.mxu0 0.0
      %1411 = vmatpush1.msra.mxu0 0.0
      %1412 = vmatprep.subr.mxu0 0.0
      %1413 = vmatpush1.msra.mxu0 0.0
      %1414 = vmatprep.subr.mxu0 0.0
      %1415 = vmatpush1.msra.mxu0 0.0
      %1416 = vmatprep.subr.mxu0 0.0
      %1417 = vmatpush1.msra.mxu0 0.0
      %1418 = vmatprep.subr.mxu0 0.0
      %1419 = vmatpush1.msra.mxu0 0.0
      %1420 = vmatprep.subr.mxu0 0.0
      %1421 = vmatpush1.msra.mxu0 0.0
      %1422 = vmatprep.subr.mxu0 0.0
      %1423 = vmatpush1.msra.mxu0 0.0
      %1424 = vmatprep.subr.mxu0 0.0
      %1425 = vmatpush1.msra.mxu0 0.0
      %1426 = vmatprep.subr.mxu0 0.0
      %1427 = vmatpush1.msra.mxu0 0.0
      %1428 = vmatprep.subr.mxu0 0.0
      %1429 = vmatpush1.msra.mxu0 0.0
      %1430 = vmatprep.subr.mxu0 0.0
      %1431 = vmatpush1.msra.mxu0 0.0
      %1432 = vmatprep.subr.mxu0 0.0
      %1433 = vmatpush1.msra.mxu0 0.0
      %1434 = vmatprep.subr.mxu0 0.0
      %1435 = vmatpush1.msra.mxu0 0.0
      %1436 = vmatprep.subr.mxu0 0.0
      %1437 = vmatpush1.msra.mxu0 0.0
      %1438 = vmatprep.subr.mxu0 0.0
      %1439 = vmatpush1.msra.mxu0 0.0
      %1440 = vmatprep.subr.mxu0 0.0
      %1441 = vmatpush1.msra.mxu0 0.0
      %1442 = vmatprep.subr.mxu0 0.0
      %1443 = vmatpush1.msra.mxu0 0.0
      %1444 = vmatprep.subr.mxu0 0.0
      %1445 = vmatpush1.msra.mxu0 0.0
      %1446 = vmatprep.subr.mxu0 0.0
      %1447 = vmatpush1.msra.mxu0 0.0
      %1448 = vmatprep.subr.mxu0 0.0
      %1449 = vmatpush1.msra.mxu0 0.0
      %1450 = vmatprep.subr.mxu0 0.0
      %1451 = vmatpush1.msra.mxu0 0.0
      %1452 = vmatprep.subr.mxu0 0.0
      %1453 = vmatpush1.msra.mxu0 0.0
      %1454 = vmatprep.subr.mxu0 0.0
      %1455 = vmatpush1.msra.mxu0 0.0
      %1456 = vmatprep.mubr.f32.mxu0 0.0
      %1457 = vmatmul.mubr.f32.gmra.mrb[0].mxu0 %v1390
      %v1458 = vpop.f32.mrb[0].mxu0
      %v1459 = vadd.f32 0.0, %v1458
      %v1460 = vpop.f32.mrb[0].mxu0
      %1461 = vdwg.mxu0
      %v1462 = vpack.c.bf16 %v1459, %v1459
      %s1463 = scalar_lea.vmem %s5, 8
      %v1464 = vld [vmem:[%s1463] sm:$0xf]
      %v1466 = vsel %vm517, %v1462, 0
      %v1469 = vsel %vm1029, %v1464, 0
      %1471 = vmatprep.subr.bf16.mxu0 0
      %1472 = vmatpush1.bf16.msra.mxu0 %v1469
      %1473 = vmatprep.subr.bf16.mxu0 0
      %1474 = vmatpush1.bf16.msra.mxu0 0
      %1475 = vmatprep.subr.bf16.mxu0 0
      %1476 = vmatpush1.bf16.msra.mxu0 0
      %1477 = vmatprep.subr.bf16.mxu0 0
      %1478 = vmatpush1.bf16.msra.mxu0 0
      %1479 = vmatprep.subr.bf16.mxu0 0
      %1480 = vmatpush1.bf16.msra.mxu0 0
      %1481 = vmatprep.subr.bf16.mxu0 0
      %1482 = vmatpush1.bf16.msra.mxu0 0
      %1483 = vmatprep.subr.bf16.mxu0 0
      %1484 = vmatpush1.bf16.msra.mxu0 0
      %1485 = vmatprep.subr.bf16.mxu0 0
      %1486 = vmatpush1.bf16.msra.mxu0 0
      %1487 = vmatprep.subr.bf16.mxu0 0
      %1488 = vmatpush1.bf16.msra.mxu0 0
      %1489 = vmatprep.subr.bf16.mxu0 0
      %1490 = vmatpush1.bf16.msra.mxu0 0
      %1491 = vmatprep.subr.bf16.mxu0 0
      %1492 = vmatpush1.bf16.msra.mxu0 0
      %1493 = vmatprep.subr.bf16.mxu0 0
      %1494 = vmatpush1.bf16.msra.mxu0 0
      %1495 = vmatprep.subr.bf16.mxu0 0
      %1496 = vmatpush1.bf16.msra.mxu0 0
      %1497 = vmatprep.subr.bf16.mxu0 0
      %1498 = vmatpush1.bf16.msra.mxu0 0
      %1499 = vmatprep.subr.bf16.mxu0 0
      %1500 = vmatpush1.bf16.msra.mxu0 0
      %1501 = vmatprep.subr.bf16.mxu0 0
      %1502 = vmatpush1.bf16.msra.mxu0 0
      %1503 = vmatprep.mubr.bf16.mxu0 0
      %1504 = vmatmul.mubr.bf16.gmra.mrb[0].mxu0 %v1466
      %v1505 = vpop.f32.mrb[0].mxu0
      %v1506 = vadd.f32 0.0, %v1505
      %v1507 = vpop.f32.mrb[0].mxu0
      %v1508 = vpop.f32.mrb[0].mxu0
      %v1509 = vpop.f32.mrb[0].mxu0
      %1510 = vdwg.mxu0
      %v1511 = vadd.f32 %v1114, %v1506
      %s1512 = scalar_lea.vmem %s4, 48
      %v1513 = vld [vmem:[%s1512] sm:$0xf]
      %v1514 = vld [vmem:[%s1512 + $0x4] sm:$0xf]
      %v1515 = vld [vmem:[%s1512 + $0x8] sm:$0xf]
      %v1516 = vld [vmem:[%s1512 + $0xc] sm:$0xf]
      %v1517 = vlaneseq
      %v1518 = vshrl.u32 %v1517, 7
      %v1519 = vsub.s32 3, %v1518
      %v1520 = vrot.slane %v330, %v1519
      %v1525 = vunpack.c.l.b16 %v1513
      %v1526 = vunpack.c.l.b16 %v1514
      %v1527 = vunpack.c.l.b16 %v1515
      %v1528 = vunpack.c.l.b16 %v1516
      %v1529 = vpack.c.b16 %v1526, %v1525
      %v1530 = vpack.c.b16 %v1528, %v1527
      %1533 = vmatprep.subr.bf16.mxu0 0
      %1534 = vmatpush1.bf16.msra.mxu0 %v1529
      %1535 = vmatprep.subr.bf16.mxu0 0
      %1536 = vmatpush1.bf16.msra.mxu0 %v1530
      %1537 = vmatprep.subr.bf16.mxu0 0
      %1538 = vmatpush1.bf16.msra.mxu0 0
      %1539 = vmatprep.subr.bf16.mxu0 0
      %1540 = vmatpush1.bf16.msra.mxu0 0
      %1541 = vmatprep.subr.bf16.mxu0 0
      %1542 = vmatpush1.bf16.msra.mxu0 0
      %1543 = vmatprep.subr.bf16.mxu0 0
      %1544 = vmatpush1.bf16.msra.mxu0 0
      %1545 = vmatprep.subr.bf16.mxu0 0
      %1546 = vmatpush1.bf16.msra.mxu0 0
      %1547 = vmatprep.subr.bf16.mxu0 0
      %1548 = vmatpush1.bf16.msra.mxu0 0
      %1549 = vmatprep.subr.bf16.mxu0 0
      %1550 = vmatpush1.bf16.msra.mxu0 0
      %1551 = vmatprep.subr.bf16.mxu0 0
      %1552 = vmatpush1.bf16.msra.mxu0 0
      %1553 = vmatprep.subr.bf16.mxu0 0
      %1554 = vmatpush1.bf16.msra.mxu0 0
      %1555 = vmatprep.subr.bf16.mxu0 0
      %1556 = vmatpush1.bf16.msra.mxu0 0
      %1557 = vmatprep.subr.bf16.mxu0 0
      %1558 = vmatpush1.bf16.msra.mxu0 0
      %1559 = vmatprep.subr.bf16.mxu0 0
      %1560 = vmatpush1.bf16.msra.mxu0 0
      %1561 = vmatprep.subr.bf16.mxu0 0
      %1562 = vmatpush1.bf16.msra.mxu0 0
      %1563 = vmatprep.subr.bf16.mxu0 0
      %1564 = vmatpush1.bf16.msra.mxu0 0
      %1565 = vmatprep.mubr.bf16.mxu0 0
      %1566 = vmatmul.mubr.bf16.gmra.mrb[0].mxu0 %v353
      %v1567 = vpop.f32.mrb[0].mxu0
      %v1568 = vadd.f32 %v1520, %v1567
      %v1569 = vpop.f32.mrb[0].mxu0
      %v1570 = vpop.f32.mrb[0].mxu0
      %v1571 = vpop.f32.mrb[0].mxu0
      %1572 = vdwg.mxu0
      %s1573 = scalar_lea.vmem %s4, 112
      %v1574 = vld [vmem:[%s1573] sm:$0xf]
      %v1575 = vld [vmem:[%s1573 + $0x4] sm:$0xf]
      %v1576 = vld [vmem:[%s1573 + $0x8] sm:$0xf]
      %v1577 = vld [vmem:[%s1573 + $0xc] sm:$0xf]
      %v1578 = vlaneseq
      %v1579 = vshrl.u32 %v1578, 7
      %v1580 = vsub.s32 7, %v1579
      %v1581 = vrot.slane %v330, %v1580
      %v1586 = vunpack.c.l.b16 %v1574
      %v1587 = vunpack.c.l.b16 %v1575
      %v1588 = vunpack.c.l.b16 %v1576
      %v1589 = vunpack.c.l.b16 %v1577
      %v1590 = vpack.c.b16 %v1587, %v1586
      %v1591 = vpack.c.b16 %v1589, %v1588
      %1594 = vmatprep.subr.bf16.mxu0 0
      %1595 = vmatpush1.bf16.msra.mxu0 %v1590
      %1596 = vmatprep.subr.bf16.mxu0 0
      %1597 = vmatpush1.bf16.msra.mxu0 %v1591
      %1598 = vmatprep.subr.bf16.mxu0 0
      %1599 = vmatpush1.bf16.msra.mxu0 0
      %1600 = vmatprep.subr.bf16.mxu0 0
      %1601 = vmatpush1.bf16.msra.mxu0 0
      %1602 = vmatprep.subr.bf16.mxu0 0
      %1603 = vmatpush1.bf16.msra.mxu0 0
      %1604 = vmatprep.subr.bf16.mxu0 0
      %1605 = vmatpush1.bf16.msra.mxu0 0
      %1606 = vmatprep.subr.bf16.mxu0 0
      %1607 = vmatpush1.bf16.msra.mxu0 0
      %1608 = vmatprep.subr.bf16.mxu0 0
      %1609 = vmatpush1.bf16.msra.mxu0 0
      %1610 = vmatprep.subr.bf16.mxu0 0
      %1611 = vmatpush1.bf16.msra.mxu0 0
      %1612 = vmatprep.subr.bf16.mxu0 0
      %1613 = vmatpush1.bf16.msra.mxu0 0
      %1614 = vmatprep.subr.bf16.mxu0 0
      %1615 = vmatpush1.bf16.msra.mxu0 0
      %1616 = vmatprep.subr.bf16.mxu0 0
      %1617 = vmatpush1.bf16.msra.mxu0 0
      %1618 = vmatprep.subr.bf16.mxu0 0
      %1619 = vmatpush1.bf16.msra.mxu0 0
      %1620 = vmatprep.subr.bf16.mxu0 0
      %1621 = vmatpush1.bf16.msra.mxu0 0
      %1622 = vmatprep.subr.bf16.mxu0 0
      %1623 = vmatpush1.bf16.msra.mxu0 0
      %1624 = vmatprep.subr.bf16.mxu0 0
      %1625 = vmatpush1.bf16.msra.mxu0 0
      %1626 = vmatprep.mubr.bf16.mxu0 0
      %1627 = vmatmul.mubr.bf16.gmra.mrb[0].mxu0 %v353
      %v1628 = vpop.f32.mrb[0].mxu0
      %v1629 = vadd.f32 %v1581, %v1628
      %v1630 = vpop.f32.mrb[0].mxu0
      %v1631 = vpop.f32.mrb[0].mxu0
      %v1632 = vpop.f32.mrb[0].mxu0
      %1633 = vdwg.mxu0
      %s1634 = scalar_lea.vmem %s4, 176
      %v1635 = vld [vmem:[%s1634] sm:$0xf]
      %v1636 = vld [vmem:[%s1634 + $0x4] sm:$0xf]
      %v1637 = vld [vmem:[%s1634 + $0x8] sm:$0xf]
      %v1638 = vld [vmem:[%s1634 + $0xc] sm:$0xf]
      %v1639 = vlaneseq
      %v1640 = vshrl.u32 %v1639, 7
      %v1641 = vsub.s32 3, %v1640
      %v1642 = vrot.slane %v331, %v1641
      %v1647 = vunpack.c.l.b16 %v1635
      %v1648 = vunpack.c.l.b16 %v1636
      %v1649 = vunpack.c.l.b16 %v1637
      %v1650 = vunpack.c.l.b16 %v1638
      %v1651 = vpack.c.b16 %v1648, %v1647
      %v1652 = vpack.c.b16 %v1650, %v1649
      %1655 = vmatprep.subr.bf16.mxu0 0
      %1656 = vmatpush1.bf16.msra.mxu0 %v1651
      %1657 = vmatprep.subr.bf16.mxu0 0
      %1658 = vmatpush1.bf16.msra.mxu0 %v1652
      %1659 = vmatprep.subr.bf16.mxu0 0
      %1660 = vmatpush1.bf16.msra.mxu0 0
      %1661 = vmatprep.subr.bf16.mxu0 0
      %1662 = vmatpush1.bf16.msra.mxu0 0
      %1663 = vmatprep.subr.bf16.mxu0 0
      %1664 = vmatpush1.bf16.msra.mxu0 0
      %1665 = vmatprep.subr.bf16.mxu0 0
      %1666 = vmatpush1.bf16.msra.mxu0 0
      %1667 = vmatprep.subr.bf16.mxu0 0
      %1668 = vmatpush1.bf16.msra.mxu0 0
      %1669 = vmatprep.subr.bf16.mxu0 0
      %1670 = vmatpush1.bf16.msra.mxu0 0
      %1671 = vmatprep.subr.bf16.mxu0 0
      %1672 = vmatpush1.bf16.msra.mxu0 0
      %1673 = vmatprep.subr.bf16.mxu0 0
      %1674 = vmatpush1.bf16.msra.mxu0 0
      %1675 = vmatprep.subr.bf16.mxu0 0
      %1676 = vmatpush1.bf16.msra.mxu0 0
      %1677 = vmatprep.subr.bf16.mxu0 0
      %1678 = vmatpush1.bf16.msra.mxu0 0
      %1679 = vmatprep.subr.bf16.mxu0 0
      %1680 = vmatpush1.bf16.msra.mxu0 0
      %1681 = vmatprep.subr.bf16.mxu0 0
      %1682 = vmatpush1.bf16.msra.mxu0 0
      %1683 = vmatprep.subr.bf16.mxu0 0
      %1684 = vmatpush1.bf16.msra.mxu0 0
      %1685 = vmatprep.subr.bf16.mxu0 0
      %1686 = vmatpush1.bf16.msra.mxu0 0
      %1687 = vmatprep.mubr.bf16.mxu0 0
      %1688 = vmatmul.mubr.bf16.gmra.mrb[0].mxu0 %v353
      %v1689 = vpop.f32.mrb[0].mxu0
      %v1690 = vadd.f32 %v1642, %v1689
      %v1691 = vpop.f32.mrb[0].mxu0
      %v1692 = vpop.f32.mrb[0].mxu0
      %v1693 = vpop.f32.mrb[0].mxu0
      %1694 = vdwg.mxu0
      %v1696 = vsel %vm517, %v1568, 0
      %v1699 = vsel %vm517, %v1629, 0
      %1701 = vmatprep.subr.mxu0 0.0
      %1702 = vmatpush1.xpose.msra.mxu0 %v1699
      %1703 = vmatprep.subr.mxu0 0.0
      %1704 = vmatpush1.xpose.msra.mxu0 0.0
      %1705 = vmatprep.subr.mxu0 0.0
      %1706 = vmatpush1.xpose.msra.mxu0 0.0
      %1707 = vmatprep.subr.mxu0 0.0
      %1708 = vmatpush1.xpose.msra.mxu0 0.0
      %1709 = vmatprep.subr.mxu0 0.0
      %1710 = vmatpush1.xpose.msra.mxu0 0.0
      %1711 = vmatprep.subr.mxu0 0.0
      %1712 = vmatpush1.xpose.msra.mxu0 0.0
      %1713 = vmatprep.subr.mxu0 0.0
      %1714 = vmatpush1.xpose.msra.mxu0 0.0
      %1715 = vmatprep.subr.mxu0 0.0
      %1716 = vmatpush1.xpose.msra.mxu0 0.0
      %1717 = vmatprep.subr.mxu0 0.0
      %1718 = vmatpush1.xpose.msra.mxu0 0.0
      %1719 = vmatprep.subr.mxu0 0.0
      %1720 = vmatpush1.xpose.msra.mxu0 0.0
      %1721 = vmatprep.subr.mxu0 0.0
      %1722 = vmatpush1.xpose.msra.mxu0 0.0
      %1723 = vmatprep.subr.mxu0 0.0
      %1724 = vmatpush1.xpose.msra.mxu0 0.0
      %1725 = vmatprep.subr.mxu0 0.0
      %1726 = vmatpush1.xpose.msra.mxu0 0.0
      %1727 = vmatprep.subr.mxu0 0.0
      %1728 = vmatpush1.xpose.msra.mxu0 0.0
      %1729 = vmatprep.subr.mxu0 0.0
      %1730 = vmatpush1.xpose.msra.mxu0 0.0
      %1731 = vmatprep.subr.mxu0 0.0
      %1732 = vmatpush1.xpose.msra.mxu0 0.0
      %1733 = vmatprep.subr.mxu0 0.0
      %1734 = vmatpush1.xpose.msra.mxu0 0.0
      %1735 = vmatprep.subr.mxu0 0.0
      %1736 = vmatpush1.xpose.msra.mxu0 0.0
      %1737 = vmatprep.subr.mxu0 0.0
      %1738 = vmatpush1.xpose.msra.mxu0 0.0
      %1739 = vmatprep.subr.mxu0 0.0
      %1740 = vmatpush1.xpose.msra.mxu0 0.0
      %1741 = vmatprep.subr.mxu0 0.0
      %1742 = vmatpush1.xpose.msra.mxu0 0.0
      %1743 = vmatprep.subr.mxu0 0.0
      %1744 = vmatpush1.xpose.msra.mxu0 0.0
      %1745 = vmatprep.subr.mxu0 0.0
      %1746 = vmatpush1.xpose.msra.mxu0 0.0
      %1747 = vmatprep.subr.mxu0 0.0
      %1748 = vmatpush1.xpose.msra.mxu0 0.0
      %1749 = vmatprep.subr.mxu0 0.0
      %1750 = vmatpush1.xpose.msra.mxu0 0.0
      %1751 = vmatprep.subr.mxu0 0.0
      %1752 = vmatpush1.xpose.msra.mxu0 0.0
      %1753 = vmatprep.subr.mxu0 0.0
      %1754 = vmatpush1.xpose.msra.mxu0 0.0
      %1755 = vmatprep.subr.mxu0 0.0
      %1756 = vmatpush1.xpose.msra.mxu0 0.0
      %1757 = vmatprep.subr.mxu0 0.0
      %1758 = vmatpush1.xpose.msra.mxu0 0.0
      %1759 = vmatprep.subr.mxu0 0.0
      %1760 = vmatpush1.xpose.msra.mxu0 0.0
      %1761 = vmatprep.subr.mxu0 0.0
      %1762 = vmatpush1.xpose.msra.mxu0 0.0
      %1763 = vmatprep.subr.mxu0 0.0
      %1764 = vmatpush1.xpose.msra.mxu0 0.0
      %1765 = vmatprep.mubr.f32.mxu0 0.0
      %1766 = vmatmul.mubr.f32.gmra.mrb[0].mxu0 %v1696
      %v1767 = vpop.f32.mrb[0].mxu0
      %v1768 = vadd.f32 0.0, %v1767
      %v1769 = vpop.f32.mrb[0].mxu0
      %1770 = vdwg.mxu0
      %v1771 = vsel %vm517, %v1768, -inf
      %1772 = vmax.xlane.f32.xlu0 %v1771
      %v1773 = vpop.xlane.xlu0 %1772
      %v1774 = vsub.f32 %v1768, %v1773
      %v1775 = vmul.f32 %v1774, 1.442695
      %v1776 = vpow.pop %v1775
      %v1777 = vsel %vm517, %v1776, 0.0
      %1778 = vadd.xlane.f32.xlu0 %v1777
      %v1779 = vpop.xlane.xlu0 %1778
      %v1780 = vrcp.pop %v1779
      %v1781 = vmul.f32 %v1776, %v1780
      %v1783 = vsel %vm517, %v1781, 0
      %1785 = vmatprep.subr.mxu0 0.0
      %1786 = vmatpush1.msra.mxu0 %v1690
      %1787 = vmatprep.subr.mxu0 0.0
      %1788 = vmatpush1.msra.mxu0 0.0
      %1789 = vmatprep.subr.mxu0 0.0
      %1790 = vmatpush1.msra.mxu0 0.0
      %1791 = vmatprep.subr.mxu0 0.0
      %1792 = vmatpush1.msra.mxu0 0.0
      %1793 = vmatprep.subr.mxu0 0.0
      %1794 = vmatpush1.msra.mxu0 0.0
      %1795 = vmatprep.subr.mxu0 0.0
      %1796 = vmatpush1.msra.mxu0 0.0
      %1797 = vmatprep.subr.mxu0 0.0
      %1798 = vmatpush1.msra.mxu0 0.0
      %1799 = vmatprep.subr.mxu0 0.0
      %1800 = vmatpush1.msra.mxu0 0.0
      %1801 = vmatprep.subr.mxu0 0.0
      %1802 = vmatpush1.msra.mxu0 0.0
      %1803 = vmatprep.subr.mxu0 0.0
      %1804 = vmatpush1.msra.mxu0 0.0
      %1805 = vmatprep.subr.mxu0 0.0
      %1806 = vmatpush1.msra.mxu0 0.0
      %1807 = vmatprep.subr.mxu0 0.0
      %1808 = vmatpush1.msra.mxu0 0.0
      %1809 = vmatprep.subr.mxu0 0.0
      %1810 = vmatpush1.msra.mxu0 0.0
      %1811 = vmatprep.subr.mxu0 0.0
      %1812 = vmatpush1.msra.mxu0 0.0
      %1813 = vmatprep.subr.mxu0 0.0
      %1814 = vmatpush1.msra.mxu0 0.0
      %1815 = vmatprep.subr.mxu0 0.0
      %1816 = vmatpush1.msra.mxu0 0.0
      %1817 = vmatprep.subr.mxu0 0.0
      %1818 = vmatpush1.msra.mxu0 0.0
      %1819 = vmatprep.subr.mxu0 0.0
      %1820 = vmatpush1.msra.mxu0 0.0
      %1821 = vmatprep.subr.mxu0 0.0
      %1822 = vmatpush1.msra.mxu0 0.0
      %1823 = vmatprep.subr.mxu0 0.0
      %1824 = vmatpush1.msra.mxu0 0.0
      %1825 = vmatprep.subr.mxu0 0.0
      %1826 = vmatpush1.msra.mxu0 0.0
      %1827 = vmatprep.subr.mxu0 0.0
      %1828 = vmatpush1.msra.mxu0 0.0
      %1829 = vmatprep.subr.mxu0 0.0
      %1830 = vmatpush1.msra.mxu0 0.0
      %1831 = vmatprep.subr.mxu0 0.0
      %1832 = vmatpush1.msra.mxu0 0.0
      %1833 = vmatprep.subr.mxu0 0.0
      %1834 = vmatpush1.msra.mxu0 0.0
      %1835 = vmatprep.subr.mxu0 0.0
      %1836 = vmatpush1.msra.mxu0 0.0
      %1837 = vmatprep.subr.mxu0 0.0
      %1838 = vmatpush1.msra.mxu0 0.0
      %1839 = vmatprep.subr.mxu0 0.0
      %1840 = vmatpush1.msra.mxu0 0.0
      %1841 = vmatprep.subr.mxu0 0.0
      %1842 = vmatpush1.msra.mxu0 0.0
      %1843 = vmatprep.subr.mxu0 0.0
      %1844 = vmatpush1.msra.mxu0 0.0
      %1845 = vmatprep.subr.mxu0 0.0
      %1846 = vmatpush1.msra.mxu0 0.0
      %1847 = vmatprep.subr.mxu0 0.0
      %1848 = vmatpush1.msra.mxu0 0.0
      %1849 = vmatprep.mubr.f32.mxu0 0.0
      %1850 = vmatmul.mubr.f32.gmra.mrb[0].mxu0 %v1783
      %v1851 = vpop.f32.mrb[0].mxu0
      %v1852 = vadd.f32 0.0, %v1851
      %v1853 = vpop.f32.mrb[0].mxu0
      %1854 = vdwg.mxu0
      %v1855 = vpack.c.bf16 %v1852, %v1852
      %s1856 = scalar_lea.vmem %s5, 12
      %v1857 = vld [vmem:[%s1856] sm:$0xf]
      %v1859 = vsel %vm517, %v1855, 0
      %v1862 = vsel %vm1029, %v1857, 0
      %1864 = vmatprep.subr.bf16.mxu0 0
      %1865 = vmatpush1.bf16.msra.mxu0 %v1862
      %1866 = vmatprep.subr.bf16.mxu0 0
      %1867 = vmatpush1.bf16.msra.mxu0 0
      %1868 = vmatprep.subr.bf16.mxu0 0
      %1869 = vmatpush1.bf16.msra.mxu0 0
      %1870 = vmatprep.subr.bf16.mxu0 0
      %1871 = vmatpush1.bf16.msra.mxu0 0
      %1872 = vmatprep.subr.bf16.mxu0 0
      %1873 = vmatpush1.bf16.msra.mxu0 0
      %1874 = vmatprep.subr.bf16.mxu0 0
      %1875 = vmatpush1.bf16.msra.mxu0 0
      %1876 = vmatprep.subr.bf16.mxu0 0
      %1877 = vmatpush1.bf16.msra.mxu0 0
      %1878 = vmatprep.subr.bf16.mxu0 0
      %1879 = vmatpush1.bf16.msra.mxu0 0
      %1880 = vmatprep.subr.bf16.mxu0 0
      %1881 = vmatpush1.bf16.msra.mxu0 0
      %1882 = vmatprep.subr.bf16.mxu0 0
      %1883 = vmatpush1.bf16.msra.mxu0 0
      %1884 = vmatprep.subr.bf16.mxu0 0
      %1885 = vmatpush1.bf16.msra.mxu0 0
      %1886 = vmatprep.subr.bf16.mxu0 0
      %1887 = vmatpush1.bf16.msra.mxu0 0
      %1888 = vmatprep.subr.bf16.mxu0 0
      %1889 = vmatpush1.bf16.msra.mxu0 0
      %1890 = vmatprep.subr.bf16.mxu0 0
      %1891 = vmatpush1.bf16.msra.mxu0 0
      %1892 = vmatprep.subr.bf16.mxu0 0
      %1893 = vmatpush1.bf16.msra.mxu0 0
      %1894 = vmatprep.subr.bf16.mxu0 0
      %1895 = vmatpush1.bf16.msra.mxu0 0
      %1896 = vmatprep.mubr.bf16.mxu0 0
      %1897 = vmatmul.mubr.bf16.gmra.mrb[0].mxu0 %v1859
      %v1898 = vpop.f32.mrb[0].mxu0
      %v1899 = vadd.f32 0.0, %v1898
      %v1900 = vpop.f32.mrb[0].mxu0
      %v1901 = vpop.f32.mrb[0].mxu0
      %v1902 = vpop.f32.mrb[0].mxu0
      %1903 = vdwg.mxu0
      %v1904 = vadd.f32 %v1511, %v1899
      %v1905 = vadd.f32 %v328, %v1904
      %v1906 = vlaneseq
      %v1907 = vshrl.u32 %v1906, 7
      %v1908 = vsub.s32 2, %v1907
      %v1909 = vrot.slane %v302, %v1908
      %v1910 = vadd.f32 %v1905, %v1909
      %v1911 = vsel %vm304, %v1910, 0.0
      %1912 = vadd.xlane.f32.xlu0 %v1911
      %v1913 = vpop.xlane.xlu0 %1912
      %v1914 = vmul.f32 %v1913, %v308
      %v1915 = vsub.f32 %v1910, %v1914
      %v1916 = vmul.f32 %v1915, %v1915
      %v1917 = vsel %vm304, %v1916, 0.0
      %1918 = vadd.xlane.f32.xlu0 %v1917
      %v1919 = vpop.xlane.xlu0 %1918
      %v1920 = vmul.f32 %v1919, %v308
      %v1921 = vadd.f32 %v1920, 1e-05
      %v1922 = vrsqrt.pop %v1921
      %v1923 = vmul.f32 %v1915, %v1922
      %v1924 = vlaneseq
      %v1925 = vshrl.u32 %v1924, 7
      %v1926 = vsub.s32 3, %v1925
      %v1927 = vrot.slane %v302, %v1926
      %v1928 = vmul.f32 %v1923, %v1927
      %v1929 = vlaneseq
      %v1930 = vshrl.u32 %v1929, 7
      %v1931 = vsub.s32 4, %v1930
      %v1932 = vrot.slane %v302, %v1931
      %v1933 = vadd.f32 %v1928, %v1932
      %v1934 = vpack.c.bf16 %v1933, %v1933
      %v1935 = vld [vmem:[%s6] sm:$0xf]
      %v1936 = vld [vmem:[%s6 + $0x4] sm:$0xf]
      %v1937 = vld [vmem:[%s6 + $0x8] sm:$0xf]
      %v1938 = vld [vmem:[%s6 + $0xc] sm:$0xf]
      %v1939 = vld [vmem:[%s3] sm:$0x1]
      %v1941 = vlaneseq
      %v1942 = vshrl.u32 %v1941, 7
      %v1943 = vsub.s32 0, %v1942
      %v1944 = vrot.slane %v1939, %v1943
      %v1950 = vunpack.c.l.b16 %v1935
      %v1951 = vunpack.c.l.b16 %v1936
      %v1952 = vunpack.c.l.b16 %v1937
      %v1953 = vunpack.c.l.b16 %v1938
      %v1954 = vpack.c.b16 %v1951, %v1950
      %v1955 = vpack.c.b16 %v1953, %v1952
      %v1959 = vsel %vm304, %v1934, 0
      %1961 = vmatprep.subr.bf16.mxu0 0
      %1962 = vmatpush1.bf16.msra.mxu0 %v1954
      %1963 = vmatprep.subr.bf16.mxu0 0
      %1964 = vmatpush1.bf16.msra.mxu0 %v1955
      %1965 = vmatprep.subr.bf16.mxu0 0
      %1966 = vmatpush1.bf16.msra.mxu0 0
      %1967 = vmatprep.subr.bf16.mxu0 0
      %1968 = vmatpush1.bf16.msra.mxu0 0
      %1969 = vmatprep.subr.bf16.mxu0 0
      %1970 = vmatpush1.bf16.msra.mxu0 0
      %1971 = vmatprep.subr.bf16.mxu0 0
      %1972 = vmatpush1.bf16.msra.mxu0 0
      %1973 = vmatprep.subr.bf16.mxu0 0
      %1974 = vmatpush1.bf16.msra.mxu0 0
      %1975 = vmatprep.subr.bf16.mxu0 0
      %1976 = vmatpush1.bf16.msra.mxu0 0
      %1977 = vmatprep.subr.bf16.mxu0 0
      %1978 = vmatpush1.bf16.msra.mxu0 0
      %1979 = vmatprep.subr.bf16.mxu0 0
      %1980 = vmatpush1.bf16.msra.mxu0 0
      %1981 = vmatprep.subr.bf16.mxu0 0
      %1982 = vmatpush1.bf16.msra.mxu0 0
      %1983 = vmatprep.subr.bf16.mxu0 0
      %1984 = vmatpush1.bf16.msra.mxu0 0
      %1985 = vmatprep.subr.bf16.mxu0 0
      %1986 = vmatpush1.bf16.msra.mxu0 0
      %1987 = vmatprep.subr.bf16.mxu0 0
      %1988 = vmatpush1.bf16.msra.mxu0 0
      %1989 = vmatprep.subr.bf16.mxu0 0
      %1990 = vmatpush1.bf16.msra.mxu0 0
      %1991 = vmatprep.subr.bf16.mxu0 0
      %1992 = vmatpush1.bf16.msra.mxu0 0
      %1993 = vmatprep.mubr.bf16.mxu0 0
      %1994 = vmatmul.mubr.bf16.gmra.mrb[0].mxu0 %v1959
      %v1995 = vpop.f32.mrb[0].mxu0
      %v1996 = vadd.f32 %v1944, %v1995
      %v1997 = vpop.f32.mrb[0].mxu0
      %v1998 = vpop.f32.mrb[0].mxu0
      %v1999 = vpop.f32.mrb[0].mxu0
      %2000 = vdwg.mxu0
      %v2001 = vmul.f32 %v1996, 1.702
      %v2002 = vxor.u32 %v2001, 2147483648
      %v2003 = vmul.f32 %v2002, 1.442695
      %v2004 = vpow.pop %v2003
      %v2005 = vadd.f32 %v2004, 1.0
      %v2006 = vrcp.pop %v2005
      %v2007 = vmul.f32 1.0, %v2006
      %v2008 = vmul.f32 %v1996, %v2007
      %v2009 = vpack.c.bf16 %v2008, %v2008
      %v2010 = vld [vmem:[%s7] sm:$0xf]
      %v2011 = vld [vmem:[%s7 + $0x4] sm:$0xf]
      %v2012 = vld [vmem:[%s7 + $0x8] sm:$0xf]
      %v2013 = vld [vmem:[%s7 + $0xc] sm:$0xf]
      %v2014 = vld [vmem:[%s7 + $0x10] sm:$0xf]
      %v2015 = vld [vmem:[%s7 + $0x14] sm:$0xf]
      %v2016 = vld [vmem:[%s7 + $0x18] sm:$0xf]
      %v2017 = vld [vmem:[%s7 + $0x1c] sm:$0xf]
      %v2018 = vld [vmem:[%s7 + $0x20] sm:$0xf]
      %v2019 = vld [vmem:[%s7 + $0x24] sm:$0xf]
      %v2020 = vld [vmem:[%s7 + $0x28] sm:$0xf]
      %v2021 = vld [vmem:[%s7 + $0x2c] sm:$0xf]
      %v2022 = vld [vmem:[%s7 + $0x30] sm:$0xf]
      %v2023 = vld [vmem:[%s7 + $0x34] sm:$0xf]
      %v2024 = vld [vmem:[%s7 + $0x38] sm:$0xf]
      %v2025 = vld [vmem:[%s7 + $0x3c] sm:$0xf]
      %v2026 = vlaneseq
      %v2027 = vshrl.u32 %v2026, 7
      %v2028 = vsub.s32 5, %v2027
      %v2029 = vrot.slane %v302, %v2028
      %v2046 = vunpack.c.l.b16 %v2010
      %v2047 = vunpack.c.l.b16 %v2011
      %v2048 = vunpack.c.l.b16 %v2012
      %v2049 = vunpack.c.l.b16 %v2013
      %v2050 = vunpack.c.l.b16 %v2014
      %v2051 = vunpack.c.l.b16 %v2015
      %v2052 = vunpack.c.l.b16 %v2016
      %v2053 = vunpack.c.l.b16 %v2017
      %v2054 = vunpack.c.l.b16 %v2018
      %v2055 = vunpack.c.l.b16 %v2019
      %v2056 = vunpack.c.l.b16 %v2020
      %v2057 = vunpack.c.l.b16 %v2021
      %v2058 = vunpack.c.l.b16 %v2022
      %v2059 = vunpack.c.l.b16 %v2023
      %v2060 = vunpack.c.l.b16 %v2024
      %v2061 = vunpack.c.l.b16 %v2025
      %v2062 = vpack.c.b16 %v2047, %v2046
      %v2063 = vpack.c.b16 %v2049, %v2048
      %v2064 = vpack.c.b16 %v2051, %v2050
      %v2065 = vpack.c.b16 %v2053, %v2052
      %v2066 = vpack.c.b16 %v2055, %v2054
      %v2067 = vpack.c.b16 %v2057, %v2056
      %v2068 = vpack.c.b16 %v2059, %v2058
      %v2069 = vpack.c.b16 %v2061, %v2060
      %2078 = vmatprep.subr.bf16.mxu0 0
      %2079 = vmatpush1.bf16.msra.mxu0 %v2062
      %2080 = vmatprep.subr.bf16.mxu0 0
      %2081 = vmatpush1.bf16.msra.mxu0 %v2063
      %2082 = vmatprep.subr.bf16.mxu0 0
      %2083 = vmatpush1.bf16.msra.mxu0 %v2064
      %2084 = vmatprep.subr.bf16.mxu0 0
      %2085 = vmatpush1.bf16.msra.mxu0 %v2065
      %2086 = vmatprep.subr.bf16.mxu0 0
      %2087 = vmatpush1.bf16.msra.mxu0 %v2066
      %2088 = vmatprep.subr.bf16.mxu0 0
      %2089 = vmatpush1.bf16.msra.mxu0 %v2067
      %2090 = vmatprep.subr.bf16.mxu0 0
      %2091 = vmatpush1.bf16.msra.mxu0 %v2068
      %2092 = vmatprep.subr.bf16.mxu0 0
      %2093 = vmatpush1.bf16.msra.mxu0 %v2069
      %2094 = vmatprep.subr.bf16.mxu0 0
      %2095 = vmatpush1.bf16.msra.mxu0 0
      %2096 = vmatprep.subr.bf16.mxu0 0
      %2097 = vmatpush1.bf16.msra.mxu0 0
      %2098 = vmatprep.subr.bf16.mxu0 0
      %2099 = vmatpush1.bf16.msra.mxu0 0
      %2100 = vmatprep.subr.bf16.mxu0 0
      %2101 = vmatpush1.bf16.msra.mxu0 0
      %2102 = vmatprep.subr.bf16.mxu0 0
      %2103 = vmatpush1.bf16.msra.mxu0 0
      %2104 = vmatprep.subr.bf16.mxu0 0
      %2105 = vmatpush1.bf16.msra.mxu0 0
      %2106 = vmatprep.subr.bf16.mxu0 0
      %2107 = vmatpush1.bf16.msra.mxu0 0
      %2108 = vmatprep.subr.bf16.mxu0 0
      %2109 = vmatpush1.bf16.msra.mxu0 0
      %2110 = vmatprep.mubr.bf16.mxu0 0
      %2111 = vmatmul.mubr.bf16.gmra.mrb[0].mxu0 %v2009
      %v2112 = vpop.f32.mrb[0].mxu0
      %v2113 = vadd.f32 %v2029, %v2112
      %v2114 = vpop.f32.mrb[0].mxu0
      %v2115 = vpop.f32.mrb[0].mxu0
      %v2116 = vpop.f32.mrb[0].mxu0
      %2117 = vdwg.mxu0
      %v2118 = vadd.f32 %v1910, %v2113
      %2119 = vst.msk [vmem:[%s300] sm:$0xff] %vm304, %v2118
      %p2120 = scmp.lt.s32.totalorder %s19, 1
      %s2121 = scalar_select %p2120, %s19, 1
      %s2122 = smul.addr %s2121, 8
      %s2123 = scalar_lea.vmem %s8, %s2122
      // Predicated region
      $region53: #{residual_attention_block.1} parent=51 // pred_check
        %p2124 = pneg %p210
      $region54: #{residual_attention_block.1} parent=51 // pred_check_branch
        %2126 = sbr.rel (%p2124) target = $region56
      $region55: #{residual_attention_block.1} parent=51 // pred_region
        _
      $region56: #{residual_attention_block.1} parent=51 // pred_fallthru
        _
    $region52: #{residual_attention_block.1} parent=5 // pred_fallthru
      _
    %p2127 = scmp.le.s32.totalorder 2, %s14
    // Predicated region
    $region57: #{residual_attention_block.1} parent=5 // pred_check
      %p2128 = pneg %p2127
    $region58: #{residual_attention_block.1} parent=5 // pred_check_branch
      %2130 = sbr.rel (%p2128) target = $region60
    $region59: #{residual_attention_block.1} parent=5 // pred_region
      %s2131 = ssub.s32 %s14, 2
      // Predicated region
      $region61: #{residual_attention_block.1} parent=59 // pred_check
        %p2132 = pneg %p216
      $region62: #{residual_attention_block.1} parent=59 // pred_check_branch
        %2134 = sbr.rel (%p2132) target = $region64
      $region63: #{residual_attention_block.1} parent=59 // pred_region
        %p2135 = scmp.lt.s32.totalorder %s20, 1
        %s2136 = scalar_select %p2135, %s20, 1
        %s2137 = smul.addr %s2136, 8
        %s2138 = scalar_lea.vmem %s8, %s2137
      $region64: #{residual_attention_block.1} parent=59 // pred_fallthru
        _
    $region60: #{residual_attention_block.1} parent=5 // pred_fallthru
      _
  $region6: #{residual_attention_block.1} parent=0 // loop_footer
    %s18 = sadd.s32 1, %s14
  $region7: #{residual_attention_block.1} parent=0 // loop_footer_branch
    %13 = sbr.rel target = $region3
  $region8: #{residual_attention_block.1} parent=0 // loop_exit
    _

</llo_original>
